<compile_context>
chip_gen: v7x
topology: tpu7x:2x2x1
jax: 0.10.0
libtpu: 0.0.40
codegen_flags: <defaults>
</compile_context>

<pallas_src>
import math
import functools

import jax
import jax.numpy as jnp
from jax.experimental import pallas as pl
from jax.experimental.pallas import tpu as pltpu


def _transformer_block_kernel(
    x_ref,       # (1, T, C)        input tile for batch b (resident across head steps)
    wqkv_ref,    # (3, 1, C, Dh)    this head's q/k/v projection weights
    bqkv_ref,    # (3, 1, 1, Dh)    this head's q/k/v biases
    wo_ref,      # (1, Dh, C)       this head's row-slice of the output projection
    bo_ref,      # (1, C)
    g1_ref,      # (1, C)           layernorm1 gamma
    be1_ref,     # (1, C)           layernorm1 beta
    wf1_ref,     # (C, F)
    bf1_ref,     # (1, F)
    wf2_ref,     # (F, C)
    bf2_ref,     # (1, C)
    g2_ref,      # (1, C)           layernorm2 gamma
    be2_ref,     # (1, C)           layernorm2 beta
    y_ref,       # (1, T, C)        output tile (written on last head step)
    attn_ref,    # (1, 1, T, T)     this head's attention probabilities
    xn1_s,       # VMEM (T, C) f32  LayerNorm1(x), computed once per batch tile
    acc_s,       # VMEM (T, C) f32  running sum_h ctx_h @ Wout_h
    *,
    d_head: int,
):
    h = pl.program_id(1)
    last_h = pl.num_programs(1) - 1
    eps = 1e-5
    inv_sqrt_d = 1.0 / math.sqrt(d_head)

    # ---- once per batch tile: LayerNorm1 + zero the projection accumulator ----
    @pl.when(h == 0)
    def _init():
        x = x_ref[0].astype(jnp.float32)
        mu = jnp.mean(x, axis=-1, keepdims=True)
        var = jnp.mean((x - mu) ** 2, axis=-1, keepdims=True)
        xn1_s[...] = (x - mu) * jax.lax.rsqrt(var + eps) * g1_ref[0] + be1_ref[0]
        acc_s[...] = jnp.zeros_like(acc_s)

    xn1 = xn1_s[...]                                                  # (T, C)

    # ---- this head's Q/K/V projection (per-head weight slices streamed by BlockSpec) ----
    q = jnp.dot(xn1, wqkv_ref[0, 0], preferred_element_type=jnp.float32) + bqkv_ref[0, 0]
    k = jnp.dot(xn1, wqkv_ref[1, 0], preferred_element_type=jnp.float32) + bqkv_ref[1, 0]
    v = jnp.dot(xn1, wqkv_ref[2, 0], preferred_element_type=jnp.float32) + bqkv_ref[2, 0]

    # ---- attention: contract the head dim of q and k directly (no explicit k.T) ----
    scores = jax.lax.dot_general(
        q, k, dimension_numbers=(((1,), (1,)), ((), ())),
        preferred_element_type=jnp.float32) * inv_sqrt_d               # (T, T)
    scores = scores - jnp.max(scores, axis=-1, keepdims=True)
    e = jnp.exp(scores)
    # Reciprocal-multiply instead of a divide (set approx=True when tolerances allow).
    p = e * pl.reciprocal(jnp.sum(e, axis=-1, keepdims=True), approx=False)
    attn_ref[0, 0] = p

    ctx = jnp.dot(p, v, preferred_element_type=jnp.float32)            # (T, Dh)
    # Accumulate this head's contribution to the output projection — no (T, C)
    # multi-head context tensor and no lane-axis concatenate is ever materialized.
    acc_s[...] += jnp.dot(ctx, wo_ref[0], preferred_element_type=jnp.float32)

    # ---- once per batch tile (last head): residual 1, LayerNorm2, FFN, residual 2 ----
    @pl.when(h == last_h)
    def _finalize():
        x = x_ref[0].astype(jnp.float32)
        x1 = x + acc_s[...] + bo_ref[0]                                 # residual 1
        mu2 = jnp.mean(x1, axis=-1, keepdims=True)
        var2 = jnp.mean((x1 - mu2) ** 2, axis=-1, keepdims=True)
        xn2 = (x1 - mu2) * jax.lax.rsqrt(var2 + eps) * g2_ref[0] + be2_ref[0]
        h1 = jnp.dot(xn2, wf1_ref[...], preferred_element_type=jnp.float32) + bf1_ref[0]
        h1 = jnp.maximum(h1, 0.0)
        ffn = jnp.dot(h1, wf2_ref[...], preferred_element_type=jnp.float32) + bf2_ref[0]
        y_ref[0] = (x1 + ffn).astype(y_ref.dtype)


def _vmem_budget_bytes(T, C, F, d_head):
    """Explicit VMEM budget: 2x-buffered blocks + scratch + in-flight temps + headroom."""
    b = 4  # f32 bytes
    per_step = (
        2 * T * C * b                               # x block
        + 2 * (3 * C * d_head + 3 * d_head) * b     # per-head qkv weights + biases
        + 2 * d_head * C * b                        # per-head out-proj slice
        + 2 * (C * F + F * C) * b                   # FFN weights
        + 2 * (6 * C + F) * b                       # biases + LN affine params
        + 2 * T * C * b                             # y block
        + 2 * T * T * b                             # attn block
        + 2 * T * C * b                             # xn1 + accumulator scratch
        + (2 * T * T + T * F + 4 * T * d_head + 2 * T * C) * b  # live temporaries
    )
    # 2x headroom for Mosaic-internal scratch, clamped to smallest physical VMEM (v7x 64 MiB).
    return int(min(max(2 * per_step, 16 * 1024 * 1024), 64 * 1024 * 1024))


def transformer_block(x, params, *, n_heads):
    """x: (B, T, C) float32. Returns (y, attn_weights) matching the PyTorch module."""
    B, T, C = x.shape
    d_head = C // n_heads
    F = params["w_ff1"].shape[1]

    # One-time host-side re-layouts so BlockSpecs can stream per-head weight slices.
    # Column layout of w_qkv follows the PyTorch reshape (..., 3, H, Dh).
    w_qkv_r = params["w_qkv"].reshape(C, 3, n_heads, d_head).transpose(1, 2, 0, 3)  # (3,H,C,Dh)
    b_qkv_r = params["b_qkv"].reshape(3, n_heads, 1, d_head)                        # (3,H,1,Dh)
    w_out_r = params["w_out"].reshape(n_heads, d_head, C)                           # (H,Dh,C)

    kernel = functools.partial(_transformer_block_kernel, d_head=d_head)

    def const(shape):
        nd = len(shape)
        return pl.BlockSpec(shape, lambda b, h, _nd=nd: (0,) * _nd)

    grid_spec = pltpu.PrefetchScalarGridSpec(
        num_scalar_prefetch=0,
        grid=(B, n_heads),
        in_specs=[
            pl.BlockSpec((1, T, C), lambda b, h: (b, 0, 0)),              # x
            pl.BlockSpec((3, 1, C, d_head), lambda b, h: (0, h, 0, 0)),   # w_qkv per head
            pl.BlockSpec((3, 1, 1, d_head), lambda b, h: (0, h, 0, 0)),   # b_qkv per head
            pl.BlockSpec((1, d_head, C), lambda b, h: (h, 0, 0)),         # w_out per head
            const((1, C)),                                                # b_out
            const((1, C)), const((1, C)),                                 # ln1 gamma/beta
            const((C, F)), const((1, F)),                                 # ffn linear 1
            const((F, C)), const((1, C)),                                 # ffn linear 2
            const((1, C)), const((1, C)),                                 # ln2 gamma/beta
        ],
        out_specs=[
            pl.BlockSpec((1, T, C), lambda b, h: (b, 0, 0)),
            pl.BlockSpec((1, 1, T, T), lambda b, h: (b, h, 0, 0)),
        ],
        scratch_shapes=[
            pltpu.VMEM((T, C), jnp.float32),   # LayerNorm1(x)
            pltpu.VMEM((T, C), jnp.float32),   # output-projection accumulator
        ],
    )

    out_shapes = (
        jax.ShapeDtypeStruct((B, T, C), x.dtype),
        jax.ShapeDtypeStruct((B, n_heads, T, T), jnp.float32),
    )

    y, attn_w = pl.pallas_call(
        kernel,
        out_shape=out_shapes,
        grid_spec=grid_spec,
        compiler_params=pltpu.CompilerParams(
            dimension_semantics=("parallel", "arbitrary"),
            vmem_limit_bytes=_vmem_budget_bytes(T, C, F, d_head),
        ),
    )(
        x,
        w_qkv_r, b_qkv_r, w_out_r, params["b_out"],
        params["ln1_g"], params["ln1_b"],
        params["w_ff1"], params["b_ff1"],
        params["w_ff2"], params["b_ff2"],
        params["ln2_g"], params["ln2_b"],
    )
    return y, attn_w


def _reference(x, params, *, n_heads):
    """Pure-JAX reference matching the PyTorch forward (dropout = identity)."""
    B, T, C = x.shape
    d_head = C // n_heads
    eps = 1e-5

    def ln(z, g, b):
        mu = jnp.mean(z, axis=-1, keepdims=True)
        var = jnp.mean((z - mu) ** 2, axis=-1, keepdims=True)
        return (z - mu) * jax.lax.rsqrt(var + eps) * g[0] + b[0]

    xn1 = ln(x, params["ln1_g"], params["ln1_b"])
    qkv = xn1 @ params["w_qkv"] + params["b_qkv"][0]
    qkv = qkv.reshape(B, T, 3, n_heads, d_head)
    q, k, v = qkv[:, :, 0], qkv[:, :, 1], qkv[:, :, 2]
    q = q.transpose(0, 2, 1, 3)
    k = k.transpose(0, 2, 1, 3)
    v = v.transpose(0, 2, 1, 3)
    scores = jnp.einsum("bhtd,bhsd->bhts", q, k) / math.sqrt(d_head)
    p = jax.nn.softmax(scores, axis=-1)
    ctx = jnp.einsum("bhts,bhsd->bhtd", p, v)
    ctx = ctx.transpose(0, 2, 1, 3).reshape(B, T, C)
    attn_out = ctx @ params["w_out"] + params["b_out"][0]
    x1 = x + attn_out
    xn2 = ln(x1, params["ln2_g"], params["ln2_b"])
    h1 = jnp.maximum(xn2 @ params["w_ff1"] + params["b_ff1"][0], 0.0)
    ffn = h1 @ params["w_ff2"] + params["b_ff2"][0]
    return x1 + ffn, p


if __name__ == "__main__":
    # Small shapes consistent with the module
    B, T = 2, 8
    d_model, n_heads, ffn_dim = 32, 4, 64

    key = jax.random.PRNGKey(0)
    keys = jax.random.split(key, 8)

    scale = 0.1
    params = {
        # weights stored as (in, out) so y = x @ W + b
        "w_qkv": scale * jax.random.normal(keys[0], (d_model, 3 * d_model), jnp.float32),
        "b_qkv": scale * jax.random.normal(keys[1], (1, 3 * d_model), jnp.float32),
        "w_out": scale * jax.random.normal(keys[2], (d_model, d_model), jnp.float32),
        "b_out": scale * jax.random.normal(keys[3], (1, d_model), jnp.float32),
        "w_ff1": scale * jax.random.normal(keys[4], (d_model, ffn_dim), jnp.float32),
        "b_ff1": scale * jax.random.normal(keys[5], (1, ffn_dim), jnp.float32),
        "w_ff2": scale * jax.random.normal(keys[6], (ffn_dim, d_model), jnp.float32),
        "b_ff2": scale * jax.random.normal(keys[7], (1, d_model), jnp.float32),
        # LayerNorm affine params (PyTorch init: gamma=1, beta=0)
        "ln1_g": jnp.ones((1, d_model), jnp.float32),
        "ln1_b": jnp.zeros((1, d_model), jnp.float32),
        "ln2_g": jnp.ones((1, d_model), jnp.float32),
        "ln2_b": jnp.zeros((1, d_model), jnp.float32),
    }

    x = jax.random.normal(jax.random.PRNGKey(42), (B, T, d_model), jnp.float32)

    y, attn_w = transformer_block(x, params, n_heads=n_heads)
    y = jax.block_until_ready(y)
    attn_w = jax.block_until_ready(attn_w)

    # sanity check against pure-JAX reference
    y_ref, p_ref = _reference(x, params, n_heads=n_heads)
    assert y.shape == (B, T, d_model)
    assert attn_w.shape == (B, n_heads, T, T)
    assert jnp.allclose(y, y_ref, atol=1e-4, rtol=1e-4)
    assert jnp.allclose(attn_w, p_ref, atol=1e-5, rtol=1e-5)

    print("KERNEL_OK")
</pallas_src>

<mosaic_0001>
module attributes {stable_mosaic.version = 11 : i64} {
  func.func @_transformer_block_kernel(%arg0: i32, %arg1: i32, %arg2: memref<1x8x32xf32, #tpu.memory_space<vmem>>, %arg3: memref<3x1x32x8xf32, #tpu.memory_space<vmem>>, %arg4: memref<3x1x1x8xf32, #tpu.memory_space<vmem>>, %arg5: memref<1x8x32xf32, #tpu.memory_space<vmem>>, %arg6: memref<1x32xf32, #tpu.memory_space<vmem>>, %arg7: memref<1x32xf32, #tpu.memory_space<vmem>>, %arg8: memref<1x32xf32, #tpu.memory_space<vmem>>, %arg9: memref<32x64xf32, #tpu.memory_space<vmem>>, %arg10: memref<1x64xf32, #tpu.memory_space<vmem>>, %arg11: memref<64x32xf32, #tpu.memory_space<vmem>>, %arg12: memref<1x32xf32, #tpu.memory_space<vmem>>, %arg13: memref<1x32xf32, #tpu.memory_space<vmem>>, %arg14: memref<1x32xf32, #tpu.memory_space<vmem>>, %arg15: memref<1x8x32xf32, #tpu.memory_space<vmem>>, %arg16: memref<1x1x8x8xf32, #tpu.memory_space<vmem>>, %arg17: memref<8x32xf32, #tpu.memory_space<vmem>>, %arg18: memref<8x32xf32, #tpu.memory_space<vmem>>) attributes {dimension_semantics = [#tpu.dimension_semantics<parallel>, #tpu.dimension_semantics<arbitrary>], iteration_bounds = array<i64: 2, 4>, scalar_prefetch = 0 : i64, scratch_operands = 2 : i64, tpu.core_type = #tpu.core_type<tc>, window_params = [{transform_indices = @transform_0, window_bounds = array<i64: 1, 8, 32>}, {transform_indices = @transform_1, window_bounds = array<i64: 3, 1, 32, 8>}, {transform_indices = @transform_2, window_bounds = array<i64: 3, 1, 1, 8>}, {transform_indices = @transform_3, window_bounds = array<i64: 1, 8, 32>}, {pipeline_mode = #tpu.pipeline_mode<synchronous>, transform_indices = @transform_4, window_bounds = array<i64: 1, 32>}, {pipeline_mode = #tpu.pipeline_mode<synchronous>, transform_indices = @transform_5, window_bounds = array<i64: 1, 32>}, {pipeline_mode = #tpu.pipeline_mode<synchronous>, transform_indices = @transform_6, window_bounds = array<i64: 1, 32>}, {pipeline_mode = #tpu.pipeline_mode<synchronous>, transform_indices = @transform_7, window_bounds = array<i64: 32, 64>}, {pipeline_mode = #tpu.pipeline_mode<synchronous>, transform_indices = @transform_8, window_bounds = array<i64: 1, 64>}, {pipeline_mode = #tpu.pipeline_mode<synchronous>, transform_indices = @transform_9, window_bounds = array<i64: 64, 32>}, {pipeline_mode = #tpu.pipeline_mode<synchronous>, transform_indices = @transform_10, window_bounds = array<i64: 1, 32>}, {pipeline_mode = #tpu.pipeline_mode<synchronous>, transform_indices = @transform_11, window_bounds = array<i64: 1, 32>}, {pipeline_mode = #tpu.pipeline_mode<synchronous>, transform_indices = @transform_12, window_bounds = array<i64: 1, 32>}, {transform_indices = @transform_13, window_bounds = array<i64: 1, 8, 32>}, {transform_indices = @transform_14, window_bounds = array<i64: 1, 1, 8, 8>}]} {
    %c0_i32 = arith.constant 0 : i32
    %0 = arith.cmpi eq, %arg1, %c0_i32 : i32
    %1 = arith.extui %0 : i1 to i32
    %c0_i32_0 = arith.constant 0 : i32
    %2 = arith.cmpi ne, %1, %c0_i32_0 : i32
    scf.if %2 {
      %c0_44 = arith.constant 0 : index
      %c0_45 = arith.constant 0 : index
      %c0_46 = arith.constant 0 : index
      %51 = vector.load %arg2[%c0_44, %c0_45, %c0_46] : memref<1x8x32xf32, #tpu.memory_space<vmem>>, vector<1x8x32xf32>
      %52 = vector.shape_cast %51 : vector<1x8x32xf32> to vector<8x32xf32>
      %cst_47 = arith.constant dense<0.000000e+00> : vector<8xf32>
      %53 = vector.multi_reduction <add>, %52, %cst_47 [1] : vector<8x32xf32> to vector<8xf32>
      %54 = vector.shape_cast %53 : vector<8xf32> to vector<8x1xf32>
      %cst_48 = arith.constant 3.200000e+01 : f32
      %55 = vector.broadcast %cst_48 : f32 to vector<8x1xf32>
      %56 = arith.divf %54, %55 : vector<8x1xf32>
      %57 = vector.broadcast %56 : vector<8x1xf32> to vector<8x32xf32>
      %58 = arith.subf %52, %57 : vector<8x32xf32>
      %59 = arith.mulf %58, %58 : vector<8x32xf32>
      %cst_49 = arith.constant dense<0.000000e+00> : vector<8xf32>
      %60 = vector.multi_reduction <add>, %59, %cst_49 [1] : vector<8x32xf32> to vector<8xf32>
      %61 = vector.shape_cast %60 : vector<8xf32> to vector<8x1xf32>
      %cst_50 = arith.constant 3.200000e+01 : f32
      %62 = vector.broadcast %cst_50 : f32 to vector<8x1xf32>
      %63 = arith.divf %61, %62 : vector<8x1xf32>
      %64 = vector.broadcast %56 : vector<8x1xf32> to vector<8x32xf32>
      %65 = arith.subf %52, %64 : vector<8x32xf32>
      %cst_51 = arith.constant 9.99999974E-6 : f32
      %66 = vector.broadcast %cst_51 : f32 to vector<8x1xf32>
      %67 = arith.addf %63, %66 : vector<8x1xf32>
      %68 = math.rsqrt %67 : vector<8x1xf32>
      %69 = vector.broadcast %68 : vector<8x1xf32> to vector<8x32xf32>
      %70 = arith.mulf %65, %69 : vector<8x32xf32>
      %c0_52 = arith.constant 0 : index
      %c0_53 = arith.constant 0 : index
      %71 = vector.load %arg7[%c0_52, %c0_53] : memref<1x32xf32, #tpu.memory_space<vmem>>, vector<1x32xf32>
      %72 = vector.shape_cast %71 : vector<1x32xf32> to vector<32xf32>
      %73 = vector.shape_cast %72 : vector<32xf32> to vector<1x32xf32>
      %74 = vector.broadcast %73 : vector<1x32xf32> to vector<8x32xf32>
      %75 = arith.mulf %70, %74 : vector<8x32xf32>
      %c0_54 = arith.constant 0 : index
      %c0_55 = arith.constant 0 : index
      %76 = vector.load %arg8[%c0_54, %c0_55] : memref<1x32xf32, #tpu.memory_space<vmem>>, vector<1x32xf32>
      %77 = vector.shape_cast %76 : vector<1x32xf32> to vector<32xf32>
      %78 = vector.shape_cast %77 : vector<32xf32> to vector<1x32xf32>
      %79 = vector.broadcast %78 : vector<1x32xf32> to vector<8x32xf32>
      %80 = arith.addf %75, %79 : vector<8x32xf32>
      %c0_56 = arith.constant 0 : index
      %c0_57 = arith.constant 0 : index
      %81 = vector.load %arg17[%c0_56, %c0_57] : memref<8x32xf32, #tpu.memory_space<vmem>>, vector<8x32xf32>
      tpu.vector_store %arg17[%c0_56, %c0_57], %80 {strides = array<i32>} : memref<8x32xf32, #tpu.memory_space<vmem>>, vector<8x32xf32>,
      %cst_58 = arith.constant 0.000000e+00 : f32
      %82 = vector.broadcast %cst_58 : f32 to vector<8x32xf32>
      %c0_59 = arith.constant 0 : index
      %c0_60 = arith.constant 0 : index
      %83 = vector.load %arg18[%c0_59, %c0_60] : memref<8x32xf32, #tpu.memory_space<vmem>>, vector<8x32xf32>
      tpu.vector_store %arg18[%c0_59, %c0_60], %82 {strides = array<i32>} : memref<8x32xf32, #tpu.memory_space<vmem>>, vector<8x32xf32>,
    } else {
    }
    %c0 = arith.constant 0 : index
    %c0_1 = arith.constant 0 : index
    %3 = vector.load %arg17[%c0, %c0_1] : memref<8x32xf32, #tpu.memory_space<vmem>>, vector<8x32xf32>
    %c0_2 = arith.constant 0 : index
    %c0_3 = arith.constant 0 : index
    %c0_4 = arith.constant 0 : index
    %c0_5 = arith.constant 0 : index
    %4 = vector.load %arg3[%c0_2, %c0_3, %c0_4, %c0_5] : memref<3x1x32x8xf32, #tpu.memory_space<vmem>>, vector<1x1x32x8xf32>
    %5 = vector.shape_cast %4 : vector<1x1x32x8xf32> to vector<32x8xf32>
    %cst = arith.constant dense<0.000000e+00> : vector<8x8xf32>
    %6 = tpu.matmul %3, %5, %cst {dimension_numbers = #tpu.dot_dimension_numbers<[1], [0], [0], [1], [0, 0, 1, 1], [], []>} : vector<8x32xf32>, vector<32x8xf32>, vector<8x8xf32> -> vector<8x8xf32>
    %c0_6 = arith.constant 0 : index
    %c0_7 = arith.constant 0 : index
    %c0_8 = arith.constant 0 : index
    %c0_9 = arith.constant 0 : index
    %7 = vector.load %arg4[%c0_6, %c0_7, %c0_8, %c0_9] : memref<3x1x1x8xf32, #tpu.memory_space<vmem>>, vector<1x1x1x8xf32>
    %8 = vector.shape_cast %7 : vector<1x1x1x8xf32> to vector<1x8xf32>
    %9 = vector.broadcast %8 : vector<1x8xf32> to vector<8x8xf32>
    %10 = arith.addf %6, %9 : vector<8x8xf32>
    %c1 = arith.constant 1 : index
    %c0_10 = arith.constant 0 : index
    %c0_11 = arith.constant 0 : index
    %c0_12 = arith.constant 0 : index
    %11 = vector.load %arg3[%c1, %c0_10, %c0_11, %c0_12] : memref<3x1x32x8xf32, #tpu.memory_space<vmem>>, vector<1x1x32x8xf32>
    %12 = vector.shape_cast %11 : vector<1x1x32x8xf32> to vector<32x8xf32>
    %cst_13 = arith.constant dense<0.000000e+00> : vector<8x8xf32>
    %13 = tpu.matmul %3, %12, %cst_13 {dimension_numbers = #tpu.dot_dimension_numbers<[1], [0], [0], [1], [0, 0, 1, 1], [], []>} : vector<8x32xf32>, vector<32x8xf32>, vector<8x8xf32> -> vector<8x8xf32>
    %c1_14 = arith.constant 1 : index
    %c0_15 = arith.constant 0 : index
    %c0_16 = arith.constant 0 : index
    %c0_17 = arith.constant 0 : index
    %14 = vector.load %arg4[%c1_14, %c0_15, %c0_16, %c0_17] : memref<3x1x1x8xf32, #tpu.memory_space<vmem>>, vector<1x1x1x8xf32>
    %15 = vector.shape_cast %14 : vector<1x1x1x8xf32> to vector<1x8xf32>
    %16 = vector.broadcast %15 : vector<1x8xf32> to vector<8x8xf32>
    %17 = arith.addf %13, %16 : vector<8x8xf32>
    %c2 = arith.constant 2 : index
    %c0_18 = arith.constant 0 : index
    %c0_19 = arith.constant 0 : index
    %c0_20 = arith.constant 0 : index
    %18 = vector.load %arg3[%c2, %c0_18, %c0_19, %c0_20] : memref<3x1x32x8xf32, #tpu.memory_space<vmem>>, vector<1x1x32x8xf32>
    %19 = vector.shape_cast %18 : vector<1x1x32x8xf32> to vector<32x8xf32>
    %cst_21 = arith.constant dense<0.000000e+00> : vector<8x8xf32>
    %20 = tpu.matmul %3, %19, %cst_21 {dimension_numbers = #tpu.dot_dimension_numbers<[1], [0], [0], [1], [0, 0, 1, 1], [], []>} : vector<8x32xf32>, vector<32x8xf32>, vector<8x8xf32> -> vector<8x8xf32>
    %c2_22 = arith.constant 2 : index
    %c0_23 = arith.constant 0 : index
    %c0_24 = arith.constant 0 : index
    %c0_25 = arith.constant 0 : index
    %21 = vector.load %arg4[%c2_22, %c0_23, %c0_24, %c0_25] : memref<3x1x1x8xf32, #tpu.memory_space<vmem>>, vector<1x1x1x8xf32>
    %22 = vector.shape_cast %21 : vector<1x1x1x8xf32> to vector<1x8xf32>
    %23 = vector.broadcast %22 : vector<1x8xf32> to vector<8x8xf32>
    %24 = arith.addf %20, %23 : vector<8x8xf32>
    %cst_26 = arith.constant dense<0.000000e+00> : vector<8x8xf32>
    %25 = tpu.matmul %10, %17, %cst_26 {dimension_numbers = #tpu.dot_dimension_numbers<[1], [1], [0], [0], [0, 0, 1, 0], [], []>} : vector<8x8xf32>, vector<8x8xf32>, vector<8x8xf32> -> vector<8x8xf32>
    %cst_27 = arith.constant 0.353553385 : f32
    %26 = vector.broadcast %cst_27 : f32 to vector<8x8xf32>
    %27 = arith.mulf %25, %26 : vector<8x8xf32>
    %cst_28 = arith.constant dense<0xFF800000> : vector<8xf32>
    %28 = vector.multi_reduction <maximumf>, %27, %cst_28 [1] : vector<8x8xf32> to vector<8xf32>
    %29 = vector.shape_cast %28 : vector<8xf32> to vector<8x1xf32>
    %30 = vector.broadcast %29 : vector<8x1xf32> to vector<8x8xf32>
    %31 = arith.subf %27, %30 : vector<8x8xf32>
    %32 = math.exp %31 : vector<8x8xf32>
    %cst_29 = arith.constant dense<0.000000e+00> : vector<8xf32>
    %33 = vector.multi_reduction <add>, %32, %cst_29 [1] : vector<8x8xf32> to vector<8xf32>
    %34 = vector.shape_cast %33 : vector<8xf32> to vector<8x1xf32>
    %35 = tpu.reciprocal %34 : vector<8x1xf32> -> vector<8x1xf32>
    %36 = vector.broadcast %35 : vector<8x1xf32> to vector<8x8xf32>
    %37 = arith.mulf %32, %36 : vector<8x8xf32>
    %c0_30 = arith.constant 0 : index
    %c0_31 = arith.constant 0 : index
    %c0_32 = arith.constant 0 : index
    %c0_33 = arith.constant 0 : index
    %38 = vector.load %arg16[%c0_30, %c0_31, %c0_32, %c0_33] : memref<1x1x8x8xf32, #tpu.memory_space<vmem>>, vector<1x1x8x8xf32>
    %39 = vector.shape_cast %38 : vector<1x1x8x8xf32> to vector<8x8xf32>
    %40 = vector.shape_cast %37 : vector<8x8xf32> to vector<1x1x8x8xf32>
    tpu.vector_store %arg16[%c0_30, %c0_31, %c0_32, %c0_33], %40 {strides = array<i32>} : memref<1x1x8x8xf32, #tpu.memory_space<vmem>>, vector<1x1x8x8xf32>,
    %cst_34 = arith.constant dense<0.000000e+00> : vector<8x8xf32>
    %41 = tpu.matmul %37, %24, %cst_34 {dimension_numbers = #tpu.dot_dimension_numbers<[1], [0], [0], [1], [0, 0, 1, 1], [], []>} : vector<8x8xf32>, vector<8x8xf32>, vector<8x8xf32> -> vector<8x8xf32>
    %c0_35 = arith.constant 0 : index
    %c0_36 = arith.constant 0 : index
    %42 = vector.load %arg18[%c0_35, %c0_36] : memref<8x32xf32, #tpu.memory_space<vmem>>, vector<8x32xf32>
    %c0_37 = arith.constant 0 : index
    %c0_38 = arith.constant 0 : index
    %c0_39 = arith.constant 0 : index
    %43 = vector.load %arg5[%c0_37, %c0_38, %c0_39] : memref<1x8x32xf32, #tpu.memory_space<vmem>>, vector<1x8x32xf32>
    %44 = vector.shape_cast %43 : vector<1x8x32xf32> to vector<8x32xf32>
    %cst_40 = arith.constant dense<0.000000e+00> : vector<8x32xf32>
    %45 = tpu.matmul %41, %44, %cst_40 {dimension_numbers = #tpu.dot_dimension_numbers<[1], [0], [0], [1], [0, 0, 1, 1], [], []>} : vector<8x8xf32>, vector<8x32xf32>, vector<8x32xf32> -> vector<8x32xf32>
    %46 = arith.addf %42, %45 : vector<8x32xf32>
    %c0_41 = arith.constant 0 : index
    %c0_42 = arith.constant 0 : index
    %47 = vector.load %arg18[%c0_41, %c0_42] : memref<8x32xf32, #tpu.memory_space<vmem>>, vector<8x32xf32>
    tpu.vector_store %arg18[%c0_41, %c0_42], %46 {strides = array<i32>} : memref<8x32xf32, #tpu.memory_space<vmem>>, vector<8x32xf32>,
    %c3_i32 = arith.constant 3 : i32
    %48 = arith.cmpi eq, %arg1, %c3_i32 : i32
    %49 = arith.extui %48 : i1 to i32
    %c0_i32_43 = arith.constant 0 : i32
    %50 = arith.cmpi ne, %49, %c0_i32_43 : i32
    scf.if %50 {
      %c0_44 = arith.constant 0 : index
      %c0_45 = arith.constant 0 : index
      %c0_46 = arith.constant 0 : index
      %51 = vector.load %arg2[%c0_44, %c0_45, %c0_46] : memref<1x8x32xf32, #tpu.memory_space<vmem>>, vector<1x8x32xf32>
      %52 = vector.shape_cast %51 : vector<1x8x32xf32> to vector<8x32xf32>
      %c0_47 = arith.constant 0 : index
      %c0_48 = arith.constant 0 : index
      %53 = vector.load %arg18[%c0_47, %c0_48] : memref<8x32xf32, #tpu.memory_space<vmem>>, vector<8x32xf32>
      %54 = arith.addf %52, %53 : vector<8x32xf32>
      %c0_49 = arith.constant 0 : index
      %c0_50 = arith.constant 0 : index
      %55 = vector.load %arg6[%c0_49, %c0_50] : memref<1x32xf32, #tpu.memory_space<vmem>>, vector<1x32xf32>
      %56 = vector.shape_cast %55 : vector<1x32xf32> to vector<32xf32>
      %57 = vector.shape_cast %56 : vector<32xf32> to vector<1x32xf32>
      %58 = vector.broadcast %57 : vector<1x32xf32> to vector<8x32xf32>
      %59 = arith.addf %54, %58 : vector<8x32xf32>
      %cst_51 = arith.constant dense<0.000000e+00> : vector<8xf32>
      %60 = vector.multi_reduction <add>, %59, %cst_51 [1] : vector<8x32xf32> to vector<8xf32>
      %61 = vector.shape_cast %60 : vector<8xf32> to vector<8x1xf32>
      %cst_52 = arith.constant 3.200000e+01 : f32
      %62 = vector.broadcast %cst_52 : f32 to vector<8x1xf32>
      %63 = arith.divf %61, %62 : vector<8x1xf32>
      %64 = vector.broadcast %63 : vector<8x1xf32> to vector<8x32xf32>
      %65 = arith.subf %59, %64 : vector<8x32xf32>
      %66 = arith.mulf %65, %65 : vector<8x32xf32>
      %cst_53 = arith.constant dense<0.000000e+00> : vector<8xf32>
      %67 = vector.multi_reduction <add>, %66, %cst_53 [1] : vector<8x32xf32> to vector<8xf32>
      %68 = vector.shape_cast %67 : vector<8xf32> to vector<8x1xf32>
      %cst_54 = arith.constant 3.200000e+01 : f32
      %69 = vector.broadcast %cst_54 : f32 to vector<8x1xf32>
      %70 = arith.divf %68, %69 : vector<8x1xf32>
      %71 = vector.broadcast %63 : vector<8x1xf32> to vector<8x32xf32>
      %72 = arith.subf %59, %71 : vector<8x32xf32>
      %cst_55 = arith.constant 9.99999974E-6 : f32
      %73 = vector.broadcast %cst_55 : f32 to vector<8x1xf32>
      %74 = arith.addf %70, %73 : vector<8x1xf32>
      %75 = math.rsqrt %74 : vector<8x1xf32>
      %76 = vector.broadcast %75 : vector<8x1xf32> to vector<8x32xf32>
      %77 = arith.mulf %72, %76 : vector<8x32xf32>
      %c0_56 = arith.constant 0 : index
      %c0_57 = arith.constant 0 : index
      %78 = vector.load %arg13[%c0_56, %c0_57] : memref<1x32xf32, #tpu.memory_space<vmem>>, vector<1x32xf32>
      %79 = vector.shape_cast %78 : vector<1x32xf32> to vector<32xf32>
      %80 = vector.shape_cast %79 : vector<32xf32> to vector<1x32xf32>
      %81 = vector.broadcast %80 : vector<1x32xf32> to vector<8x32xf32>
      %82 = arith.mulf %77, %81 : vector<8x32xf32>
      %c0_58 = arith.constant 0 : index
      %c0_59 = arith.constant 0 : index
      %83 = vector.load %arg14[%c0_58, %c0_59] : memref<1x32xf32, #tpu.memory_space<vmem>>, vector<1x32xf32>
      %84 = vector.shape_cast %83 : vector<1x32xf32> to vector<32xf32>
      %85 = vector.shape_cast %84 : vector<32xf32> to vector<1x32xf32>
      %86 = vector.broadcast %85 : vector<1x32xf32> to vector<8x32xf32>
      %87 = arith.addf %82, %86 : vector<8x32xf32>
      %c0_60 = arith.constant 0 : index
      %c0_61 = arith.constant 0 : index
      %88 = vector.load %arg9[%c0_60, %c0_61] : memref<32x64xf32, #tpu.memory_space<vmem>>, vector<32x64xf32>
      %cst_62 = arith.constant dense<0.000000e+00> : vector<8x64xf32>
      %89 = tpu.matmul %87, %88, %cst_62 {dimension_numbers = #tpu.dot_dimension_numbers<[1], [0], [0], [1], [0, 0, 1, 1], [], []>} : vector<8x32xf32>, vector<32x64xf32>, vector<8x64xf32> -> vector<8x64xf32>
      %c0_63 = arith.constant 0 : index
      %c0_64 = arith.constant 0 : index
      %90 = vector.load %arg10[%c0_63, %c0_64] : memref<1x64xf32, #tpu.memory_space<vmem>>, vector<1x64xf32>
      %91 = vector.shape_cast %90 : vector<1x64xf32> to vector<64xf32>
      %92 = vector.shape_cast %91 : vector<64xf32> to vector<1x64xf32>
      %93 = vector.broadcast %92 : vector<1x64xf32> to vector<8x64xf32>
      %94 = arith.addf %89, %93 : vector<8x64xf32>
      %cst_65 = arith.constant 0.000000e+00 : f32
      %95 = vector.broadcast %cst_65 : f32 to vector<8x64xf32>
      %96 = arith.maximumf %94, %95 : vector<8x64xf32>
      %c0_66 = arith.constant 0 : index
      %c0_67 = arith.constant 0 : index
      %97 = vector.load %arg11[%c0_66, %c0_67] : memref<64x32xf32, #tpu.memory_space<vmem>>, vector<64x32xf32>
      %cst_68 = arith.constant dense<0.000000e+00> : vector<8x32xf32>
      %98 = tpu.matmul %96, %97, %cst_68 {dimension_numbers = #tpu.dot_dimension_numbers<[1], [0], [0], [1], [0, 0, 1, 1], [], []>} : vector<8x64xf32>, vector<64x32xf32>, vector<8x32xf32> -> vector<8x32xf32>
      %c0_69 = arith.constant 0 : index
      %c0_70 = arith.constant 0 : index
      %99 = vector.load %arg12[%c0_69, %c0_70] : memref<1x32xf32, #tpu.memory_space<vmem>>, vector<1x32xf32>
      %100 = vector.shape_cast %99 : vector<1x32xf32> to vector<32xf32>
      %101 = vector.shape_cast %100 : vector<32xf32> to vector<1x32xf32>
      %102 = vector.broadcast %101 : vector<1x32xf32> to vector<8x32xf32>
      %103 = arith.addf %98, %102 : vector<8x32xf32>
      %104 = arith.addf %59, %103 : vector<8x32xf32>
      %c0_71 = arith.constant 0 : index
      %c0_72 = arith.constant 0 : index
      %c0_73 = arith.constant 0 : index
      %105 = vector.load %arg15[%c0_71, %c0_72, %c0_73] : memref<1x8x32xf32, #tpu.memory_space<vmem>>, vector<1x8x32xf32>
      %106 = vector.shape_cast %105 : vector<1x8x32xf32> to vector<8x32xf32>
      %107 = vector.shape_cast %104 : vector<8x32xf32> to vector<1x8x32xf32>
      tpu.vector_store %arg15[%c0_71, %c0_72, %c0_73], %107 {strides = array<i32>} : memref<1x8x32xf32, #tpu.memory_space<vmem>>, vector<1x8x32xf32>,
    } else {
    }
    return
  }
  func.func @transform_0(%arg0: i32, %arg1: i32) -> (i32, i32, i32) {
    %c0_i32 = arith.constant 0 : i32
    %c0_i32_0 = arith.constant 0 : i32
    %c0_i32_1 = arith.constant 0 : i32
    return %arg0, %c0_i32, %c0_i32_0 : i32, i32, i32
  }
  func.func @transform_1(%arg0: i32, %arg1: i32) -> (i32, i32, i32, i32) {
    %c0_i32 = arith.constant 0 : i32
    %c0_i32_0 = arith.constant 0 : i32
    %c0_i32_1 = arith.constant 0 : i32
    %c0_i32_2 = arith.constant 0 : i32
    return %c0_i32, %arg1, %c0_i32_0, %c0_i32_1 : i32, i32, i32, i32
  }
  func.func @transform_2(%arg0: i32, %arg1: i32) -> (i32, i32, i32, i32) {
    %c0_i32 = arith.constant 0 : i32
    %c0_i32_0 = arith.constant 0 : i32
    %c0_i32_1 = arith.constant 0 : i32
    %c0_i32_2 = arith.constant 0 : i32
    return %c0_i32, %arg1, %c0_i32_0, %c0_i32_1 : i32, i32, i32, i32
  }
  func.func @transform_3(%arg0: i32, %arg1: i32) -> (i32, i32, i32) {
    %c0_i32 = arith.constant 0 : i32
    %c0_i32_0 = arith.constant 0 : i32
    %c0_i32_1 = arith.constant 0 : i32
    return %arg1, %c0_i32, %c0_i32_0 : i32, i32, i32
  }
  func.func @transform_4(%arg0: i32, %arg1: i32) -> (i32, i32) {
    %c0_i32 = arith.constant 0 : i32
    %c0_i32_0 = arith.constant 0 : i32
    %c0_i32_1 = arith.constant 0 : i32
    return %c0_i32, %c0_i32_0 : i32, i32
  }
  func.func @transform_5(%arg0: i32, %arg1: i32) -> (i32, i32) {
    %c0_i32 = arith.constant 0 : i32
    %c0_i32_0 = arith.constant 0 : i32
    %c0_i32_1 = arith.constant 0 : i32
    return %c0_i32, %c0_i32_0 : i32, i32
  }
  func.func @transform_6(%arg0: i32, %arg1: i32) -> (i32, i32) {
    %c0_i32 = arith.constant 0 : i32
    %c0_i32_0 = arith.constant 0 : i32
    %c0_i32_1 = arith.constant 0 : i32
    return %c0_i32, %c0_i32_0 : i32, i32
  }
  func.func @transform_7(%arg0: i32, %arg1: i32) -> (i32, i32) {
    %c0_i32 = arith.constant 0 : i32
    %c0_i32_0 = arith.constant 0 : i32
    %c0_i32_1 = arith.constant 0 : i32
    return %c0_i32, %c0_i32_0 : i32, i32
  }
  func.func @transform_8(%arg0: i32, %arg1: i32) -> (i32, i32) {
    %c0_i32 = arith.constant 0 : i32
    %c0_i32_0 = arith.constant 0 : i32
    %c0_i32_1 = arith.constant 0 : i32
    return %c0_i32, %c0_i32_0 : i32, i32
  }
  func.func @transform_9(%arg0: i32, %arg1: i32) -> (i32, i32) {
    %c0_i32 = arith.constant 0 : i32
    %c0_i32_0 = arith.constant 0 : i32
    %c0_i32_1 = arith.constant 0 : i32
    return %c0_i32, %c0_i32_0 : i32, i32
  }
  func.func @transform_10(%arg0: i32, %arg1: i32) -> (i32, i32) {
    %c0_i32 = arith.constant 0 : i32
    %c0_i32_0 = arith.constant 0 : i32
    %c0_i32_1 = arith.constant 0 : i32
    return %c0_i32, %c0_i32_0 : i32, i32
  }
  func.func @transform_11(%arg0: i32, %arg1: i32) -> (i32, i32) {
    %c0_i32 = arith.constant 0 : i32
    %c0_i32_0 = arith.constant 0 : i32
    %c0_i32_1 = arith.constant 0 : i32
    return %c0_i32, %c0_i32_0 : i32, i32
  }
  func.func @transform_12(%arg0: i32, %arg1: i32) -> (i32, i32) {
    %c0_i32 = arith.constant 0 : i32
    %c0_i32_0 = arith.constant 0 : i32
    %c0_i32_1 = arith.constant 0 : i32
    return %c0_i32, %c0_i32_0 : i32, i32
  }
  func.func @transform_13(%arg0: i32, %arg1: i32) -> (i32, i32, i32) {
    %c0_i32 = arith.constant 0 : i32
    %c0_i32_0 = arith.constant 0 : i32
    %c0_i32_1 = arith.constant 0 : i32
    return %arg0, %c0_i32, %c0_i32_0 : i32, i32, i32
  }
  func.func @transform_14(%arg0: i32, %arg1: i32) -> (i32, i32, i32, i32) {
    %c0_i32 = arith.constant 0 : i32
    %c0_i32_0 = arith.constant 0 : i32
    %c0_i32_1 = arith.constant 0 : i32
    return %arg0, %arg1, %c0_i32, %c0_i32_0 : i32, i32, i32, i32
  }
}

</mosaic_0001>

<llo_original>
// kernel: tpu_custom_call.1
$region0: #{tpu_custom_call.1}
  #allocation0 [shape = 'u32[]', space=smem, size = 0x4, offset = 0x4, fixed_abs, tag = 'smem constant byte address 0x4 - core index']
  #allocation1 [shape = 'u32[144,128]{1,0:T(1,128)}', space=vmem, size = 0x12000, scoped, tag = 'internal scratch']
  #allocation2 [shape = 'f32[8,32]{1,0:T(8,128)}', space=vmem, size = 0x1000, scoped, tag = 'scratch operand']
  #allocation3 [shape = 'f32[8,32]{1,0:T(8,128)}', space=vmem, size = 0x1000, scoped, tag = 'scratch operand']
  %s0 = inlined_call_operand.vmem [shape: f32[2,8,32], index: 0, kind: input, shape index: {}]
  %s1 = inlined_call_operand.vmem [shape: f32[3,4,32,8], index: 1, kind: input, shape index: {}]
  %s2 = inlined_call_operand.vmem [shape: f32[3,4,1,8], index: 2, kind: input, shape index: {}]
  %s3 = inlined_call_operand.vmem [shape: f32[4,8,32], index: 3, kind: input, shape index: {}]
  %s4 = inlined_call_operand.vmem [shape: f32[1,32], index: 4, kind: input, shape index: {}]
  %s5 = inlined_call_operand.vmem [shape: f32[1,32], index: 5, kind: input, shape index: {}]
  %s6 = inlined_call_operand.vmem [shape: f32[1,32], index: 6, kind: input, shape index: {}]
  %s7 = inlined_call_operand.vmem [shape: f32[32,64], index: 7, kind: input, shape index: {}]
  %s8 = inlined_call_operand.vmem [shape: f32[1,64], index: 8, kind: input, shape index: {}]
  %s9 = inlined_call_operand.vmem [shape: f32[64,32], index: 9, kind: input, shape index: {}]
  %s10 = inlined_call_operand.vmem [shape: f32[1,32], index: 10, kind: input, shape index: {}]
  %s11 = inlined_call_operand.vmem [shape: f32[1,32], index: 11, kind: input, shape index: {}]
  %s12 = inlined_call_operand.vmem [shape: f32[1,32], index: 12, kind: input, shape index: {}]
  %s13 = inlined_call_operand.hbm [shape: f32[2,8,32], index: 13, kind: output, shape index: {0}]
  %s14 = inlined_call_operand.hbm [shape: f32[2,4,8,8], index: 14, kind: output, shape index: {1}]
  %15 = xla_tuple %s13, %s14
  %s16 = sld [smem:[#allocation0]]
  $region173: #{tpu_custom_call.1} parent=0
    _
  %s18 = ssub.s32 1, %s16
  %s19 = scalar_select 0, %s18, %s16
  $region1: #{tpu_custom_call.1} parent=0
    #allocation4 [shape = 'u8[98304]{0}', space=vmem, size = 0x18000, scoped, tag = 'input window, operand 1']
    #allocation5 [shape = 'u8[3072]{0}', space=vmem, size = 0xc00, scoped, tag = 'input window, operand 2']
    #allocation6 [shape = 'u8[8192]{0}', space=vmem, size = 0x2000, scoped, tag = 'output window, operand 0']
    #allocation7 [shape = 's32[2]{0}', space=sflag, size = 0x8, scoped, tag = 'scoped memory for tpu_custom_call.1']
    #allocation8 [shape = 'u8[8192]{0}', space=vmem, size = 0x2000, scoped, tag = 'output window, operand 1']
    #allocation9 [shape = 's32[2]{0}', space=sflag, size = 0x8, scoped, tag = 'scoped memory for tpu_custom_call.1']
    %20 = vsyncpa [#allocation7], 0
    %s21 = scalar_lea.sflag [#allocation7], 1
    %22 = vsyncpa %s21, 0
    %23 = vsyncpa [#allocation9], 0
    %s24 = scalar_lea.sflag [#allocation9], 1
    %25 = vsyncpa %s24, 0
    loop: start=0, step=1, limit=10
    $region2: #{tpu_custom_call.1} parent=1 // loop_pre_header
      _
    $region3: #{tpu_custom_call.1} parent=1 // loop_header
      %s27 = sphi 0, %s31
      %p28 = scmp.ge.s32.totalorder %s27, 10
      %s34 = sphi 0, %s46
      %s35 = sphi 0, %s42
      %s36 = sphi 0, %s34
      %s37 = sphi 0, %s35
      %s38 = sphi 0, %s36
      %s39 = sphi 0, %s37
      %s49 = sphi 0, %s51
      %s52 = sphi 0, %s49
      %s53 = sphi 0, %s52
      %s69 = sphi 0, %s53
      %s75 = sphi 0, %s77
      %s78 = sphi 0, %s75
      %s79 = sphi 0, %s78
      %s95 = sphi 0, %s79
      %s101 = sphi 0, %s103
      %s104 = sphi 0, %s101
      %s105 = sphi 0, %s104
      %s121 = sphi 0, %s105
      %s127 = sphi 0, %s129
      %s130 = sphi 0, %s127
      %s131 = sphi 0, %s130
      %s147 = sphi 0, %s131
      %s151 = sphi 0, %s151
      %s153 = sphi 0, %s151
      %s154 = sphi 0, %s153
      %s168 = sphi 0, %s154
      %s172 = sphi 0, %s172
      %s174 = sphi 0, %s172
      %s175 = sphi 0, %s174
      %s189 = sphi 0, %s175
      %s193 = sphi 0, %s193
      %s195 = sphi 0, %s193
      %s196 = sphi 0, %s195
      %s210 = sphi 0, %s196
      %s214 = sphi 0, %s214
      %s216 = sphi 0, %s214
      %s217 = sphi 0, %s216
      %s231 = sphi 0, %s217
      %s235 = sphi 0, %s235
      %s237 = sphi 0, %s235
      %s238 = sphi 0, %s237
      %s252 = sphi 0, %s238
      %s256 = sphi 0, %s256
      %s258 = sphi 0, %s256
      %s259 = sphi 0, %s258
      %s273 = sphi 0, %s259
      %s277 = sphi 0, %s277
      %s279 = sphi 0, %s277
      %s280 = sphi 0, %s279
      %s294 = sphi 0, %s280
      %s298 = sphi 0, %s298
      %s300 = sphi 0, %s298
      %s301 = sphi 0, %s300
      %s315 = sphi 0, %s301
      %s319 = sphi 0, %s319
      %s321 = sphi 0, %s319
      %s322 = sphi 0, %s321
      %s336 = sphi 0, %s322
      %s342 = sphi 0, %s344
      %s345 = sphi 0, %s342
      %s346 = sphi 0, %s345
      %s362 = sphi 0, %s346
      %s370 = sphi 0, %s372
      %s373 = sphi 0, %s370
      %s374 = sphi 0, %s373
      %s390 = sphi 0, %s374
    $region4: #{tpu_custom_call.1} parent=1 // loop_header_branch
      %30 = sbr.rel (%p28) target = $region8
    $region5: #{tpu_custom_call.1} parent=1 // loop_body
      %s32 = ssub.s32 %s27, 1
      %s33 = ssub.s32 %s27, 2
      %s40 = sadd.s32 1, %s35
      %p41 = scmp.ge.s32.totalorder %s40, 4
      %s42 = scalar_select %p41, 0, %s40
      %s43 = sadd.s32 1, %s34
      %s44 = scalar_select %p41, %s43, %s34
      %p45 = scmp.ge.s32.totalorder %s44, 2
      %s46 = scalar_select %p45, 0, %s44
      %s47 = ssub.s32 %s34, %s46
      %p48 = scmp.eq.s32.totalorder %s47, 0
      %s50 = sadd.s32 %s49, 1
      %s51 = scalar_select %p48, %s49, %s50
      %p54 = pneg %p48
      %p55 = scmp.eq.s32.totalorder %s27, 7
      %p56 = por %p54, %p55
      %p57 = scmp.ne.s32.totalorder %s49, %s52
      %p58 = scmp.eq.s32.totalorder %s27, 0
      %p59 = por %p57, %p58
      %p60 = scmp.ne.s32.totalorder %s49, %s52
      %p61 = scmp.eq.s32.totalorder %s32, 7
      %p62 = por %p60, %p61
      %p63 = scmp.ne.s32.totalorder %s52, %s53
      %p64 = scmp.eq.s32.totalorder %s32, 0
      %p65 = por %p63, %p64
      %p66 = scmp.ne.s32.totalorder %s52, %s53
      %p67 = scmp.eq.s32.totalorder %s33, 7
      %p68 = por %p66, %p67
      %p70 = scmp.ne.s32.totalorder %s53, %s69
      %p71 = scmp.eq.s32.totalorder %s33, 0
      %p72 = por %p70, %p71
      %s73 = ssub.s32 %s35, %s42
      %p74 = scmp.eq.s32.totalorder %s73, 0
      %s76 = sadd.s32 %s75, 1
      %s77 = scalar_select %p74, %s75, %s76
      %p80 = pneg %p74
      %p81 = scmp.eq.s32.totalorder %s27, 7
      %p82 = por %p80, %p81
      %p83 = scmp.ne.s32.totalorder %s75, %s78
      %p84 = scmp.eq.s32.totalorder %s27, 0
      %p85 = por %p83, %p84
      %p86 = scmp.ne.s32.totalorder %s75, %s78
      %p87 = scmp.eq.s32.totalorder %s32, 7
      %p88 = por %p86, %p87
      %p89 = scmp.ne.s32.totalorder %s78, %s79
      %p90 = scmp.eq.s32.totalorder %s32, 0
      %p91 = por %p89, %p90
      %p92 = scmp.ne.s32.totalorder %s78, %s79
      %p93 = scmp.eq.s32.totalorder %s33, 7
      %p94 = por %p92, %p93
      %p96 = scmp.ne.s32.totalorder %s79, %s95
      %p97 = scmp.eq.s32.totalorder %s33, 0
      %p98 = por %p96, %p97
      %s99 = ssub.s32 %s35, %s42
      %p100 = scmp.eq.s32.totalorder %s99, 0
      %s102 = sadd.s32 %s101, 1
      %s103 = scalar_select %p100, %s101, %s102
      %p106 = pneg %p100
      %p107 = scmp.eq.s32.totalorder %s27, 7
      %p108 = por %p106, %p107
      %p109 = scmp.ne.s32.totalorder %s101, %s104
      %p110 = scmp.eq.s32.totalorder %s27, 0
      %p111 = por %p109, %p110
      %p112 = scmp.ne.s32.totalorder %s101, %s104
      %p113 = scmp.eq.s32.totalorder %s32, 7
      %p114 = por %p112, %p113
      %p115 = scmp.ne.s32.totalorder %s104, %s105
      %p116 = scmp.eq.s32.totalorder %s32, 0
      %p117 = por %p115, %p116
      %p118 = scmp.ne.s32.totalorder %s104, %s105
      %p119 = scmp.eq.s32.totalorder %s33, 7
      %p120 = por %p118, %p119
      %p122 = scmp.ne.s32.totalorder %s105, %s121
      %p123 = scmp.eq.s32.totalorder %s33, 0
      %p124 = por %p122, %p123
      %s125 = ssub.s32 %s35, %s42
      %p126 = scmp.eq.s32.totalorder %s125, 0
      %s128 = sadd.s32 %s127, 1
      %s129 = scalar_select %p126, %s127, %s128
      %p132 = pneg %p126
      %p133 = scmp.eq.s32.totalorder %s27, 7
      %p134 = por %p132, %p133
      %p135 = scmp.ne.s32.totalorder %s127, %s130
      %p136 = scmp.eq.s32.totalorder %s27, 0
      %p137 = por %p135, %p136
      %p138 = scmp.ne.s32.totalorder %s127, %s130
      %p139 = scmp.eq.s32.totalorder %s32, 7
      %p140 = por %p138, %p139
      %p141 = scmp.ne.s32.totalorder %s130, %s131
      %p142 = scmp.eq.s32.totalorder %s32, 0
      %p143 = por %p141, %p142
      %p144 = scmp.ne.s32.totalorder %s130, %s131
      %p145 = scmp.eq.s32.totalorder %s33, 7
      %p146 = por %p144, %p145
      %p148 = scmp.ne.s32.totalorder %s131, %s147
      %p149 = scmp.eq.s32.totalorder %s33, 0
      %p150 = por %p148, %p149
      %s152 = sadd.s32 %s151, 1
      %p155 = scmp.eq.s32.totalorder %s27, 7
      %p156 = scmp.ne.s32.totalorder %s151, %s153
      %p157 = scmp.eq.s32.totalorder %s27, 0
      %p158 = por %p156, %p157
      %p159 = scmp.ne.s32.totalorder %s151, %s153
      %p160 = scmp.eq.s32.totalorder %s32, 7
      %p161 = por %p159, %p160
      %p162 = scmp.ne.s32.totalorder %s153, %s154
      %p163 = scmp.eq.s32.totalorder %s32, 0
      %p164 = por %p162, %p163
      %p165 = scmp.ne.s32.totalorder %s153, %s154
      %p166 = scmp.eq.s32.totalorder %s33, 7
      %p167 = por %p165, %p166
      %p169 = scmp.ne.s32.totalorder %s154, %s168
      %p170 = scmp.eq.s32.totalorder %s33, 0
      %p171 = por %p169, %p170
      %s173 = sadd.s32 %s172, 1
      %p176 = scmp.eq.s32.totalorder %s27, 7
      %p177 = scmp.ne.s32.totalorder %s172, %s174
      %p178 = scmp.eq.s32.totalorder %s27, 0
      %p179 = por %p177, %p178
      %p180 = scmp.ne.s32.totalorder %s172, %s174
      %p181 = scmp.eq.s32.totalorder %s32, 7
      %p182 = por %p180, %p181
      %p183 = scmp.ne.s32.totalorder %s174, %s175
      %p184 = scmp.eq.s32.totalorder %s32, 0
      %p185 = por %p183, %p184
      %p186 = scmp.ne.s32.totalorder %s174, %s175
      %p187 = scmp.eq.s32.totalorder %s33, 7
      %p188 = por %p186, %p187
      %p190 = scmp.ne.s32.totalorder %s175, %s189
      %p191 = scmp.eq.s32.totalorder %s33, 0
      %p192 = por %p190, %p191
      %s194 = sadd.s32 %s193, 1
      %p197 = scmp.eq.s32.totalorder %s27, 7
      %p198 = scmp.ne.s32.totalorder %s193, %s195
      %p199 = scmp.eq.s32.totalorder %s27, 0
      %p200 = por %p198, %p199
      %p201 = scmp.ne.s32.totalorder %s193, %s195
      %p202 = scmp.eq.s32.totalorder %s32, 7
      %p203 = por %p201, %p202
      %p204 = scmp.ne.s32.totalorder %s195, %s196
      %p205 = scmp.eq.s32.totalorder %s32, 0
      %p206 = por %p204, %p205
      %p207 = scmp.ne.s32.totalorder %s195, %s196
      %p208 = scmp.eq.s32.totalorder %s33, 7
      %p209 = por %p207, %p208
      %p211 = scmp.ne.s32.totalorder %s196, %s210
      %p212 = scmp.eq.s32.totalorder %s33, 0
      %p213 = por %p211, %p212
      %s215 = sadd.s32 %s214, 1
      %p218 = scmp.eq.s32.totalorder %s27, 7
      %p219 = scmp.ne.s32.totalorder %s214, %s216
      %p220 = scmp.eq.s32.totalorder %s27, 0
      %p221 = por %p219, %p220
      %p222 = scmp.ne.s32.totalorder %s214, %s216
      %p223 = scmp.eq.s32.totalorder %s32, 7
      %p224 = por %p222, %p223
      %p225 = scmp.ne.s32.totalorder %s216, %s217
      %p226 = scmp.eq.s32.totalorder %s32, 0
      %p227 = por %p225, %p226
      %p228 = scmp.ne.s32.totalorder %s216, %s217
      %p229 = scmp.eq.s32.totalorder %s33, 7
      %p230 = por %p228, %p229
      %p232 = scmp.ne.s32.totalorder %s217, %s231
      %p233 = scmp.eq.s32.totalorder %s33, 0
      %p234 = por %p232, %p233
      %s236 = sadd.s32 %s235, 1
      %p239 = scmp.eq.s32.totalorder %s27, 7
      %p240 = scmp.ne.s32.totalorder %s235, %s237
      %p241 = scmp.eq.s32.totalorder %s27, 0
      %p242 = por %p240, %p241
      %p243 = scmp.ne.s32.totalorder %s235, %s237
      %p244 = scmp.eq.s32.totalorder %s32, 7
      %p245 = por %p243, %p244
      %p246 = scmp.ne.s32.totalorder %s237, %s238
      %p247 = scmp.eq.s32.totalorder %s32, 0
      %p248 = por %p246, %p247
      %p249 = scmp.ne.s32.totalorder %s237, %s238
      %p250 = scmp.eq.s32.totalorder %s33, 7
      %p251 = por %p249, %p250
      %p253 = scmp.ne.s32.totalorder %s238, %s252
      %p254 = scmp.eq.s32.totalorder %s33, 0
      %p255 = por %p253, %p254
      %s257 = sadd.s32 %s256, 1
      %p260 = scmp.eq.s32.totalorder %s27, 7
      %p261 = scmp.ne.s32.totalorder %s256, %s258
      %p262 = scmp.eq.s32.totalorder %s27, 0
      %p263 = por %p261, %p262
      %p264 = scmp.ne.s32.totalorder %s256, %s258
      %p265 = scmp.eq.s32.totalorder %s32, 7
      %p266 = por %p264, %p265
      %p267 = scmp.ne.s32.totalorder %s258, %s259
      %p268 = scmp.eq.s32.totalorder %s32, 0
      %p269 = por %p267, %p268
      %p270 = scmp.ne.s32.totalorder %s258, %s259
      %p271 = scmp.eq.s32.totalorder %s33, 7
      %p272 = por %p270, %p271
      %p274 = scmp.ne.s32.totalorder %s259, %s273
      %p275 = scmp.eq.s32.totalorder %s33, 0
      %p276 = por %p274, %p275
      %s278 = sadd.s32 %s277, 1
      %p281 = scmp.eq.s32.totalorder %s27, 7
      %p282 = scmp.ne.s32.totalorder %s277, %s279
      %p283 = scmp.eq.s32.totalorder %s27, 0
      %p284 = por %p282, %p283
      %p285 = scmp.ne.s32.totalorder %s277, %s279
      %p286 = scmp.eq.s32.totalorder %s32, 7
      %p287 = por %p285, %p286
      %p288 = scmp.ne.s32.totalorder %s279, %s280
      %p289 = scmp.eq.s32.totalorder %s32, 0
      %p290 = por %p288, %p289
      %p291 = scmp.ne.s32.totalorder %s279, %s280
      %p292 = scmp.eq.s32.totalorder %s33, 7
      %p293 = por %p291, %p292
      %p295 = scmp.ne.s32.totalorder %s280, %s294
      %p296 = scmp.eq.s32.totalorder %s33, 0
      %p297 = por %p295, %p296
      %s299 = sadd.s32 %s298, 1
      %p302 = scmp.eq.s32.totalorder %s27, 7
      %p303 = scmp.ne.s32.totalorder %s298, %s300
      %p304 = scmp.eq.s32.totalorder %s27, 0
      %p305 = por %p303, %p304
      %p306 = scmp.ne.s32.totalorder %s298, %s300
      %p307 = scmp.eq.s32.totalorder %s32, 7
      %p308 = por %p306, %p307
      %p309 = scmp.ne.s32.totalorder %s300, %s301
      %p310 = scmp.eq.s32.totalorder %s32, 0
      %p311 = por %p309, %p310
      %p312 = scmp.ne.s32.totalorder %s300, %s301
      %p313 = scmp.eq.s32.totalorder %s33, 7
      %p314 = por %p312, %p313
      %p316 = scmp.ne.s32.totalorder %s301, %s315
      %p317 = scmp.eq.s32.totalorder %s33, 0
      %p318 = por %p316, %p317
      %s320 = sadd.s32 %s319, 1
      %p323 = scmp.eq.s32.totalorder %s27, 7
      %p324 = scmp.ne.s32.totalorder %s319, %s321
      %p325 = scmp.eq.s32.totalorder %s27, 0
      %p326 = por %p324, %p325
      %p327 = scmp.ne.s32.totalorder %s319, %s321
      %p328 = scmp.eq.s32.totalorder %s32, 7
      %p329 = por %p327, %p328
      %p330 = scmp.ne.s32.totalorder %s321, %s322
      %p331 = scmp.eq.s32.totalorder %s32, 0
      %p332 = por %p330, %p331
      %p333 = scmp.ne.s32.totalorder %s321, %s322
      %p334 = scmp.eq.s32.totalorder %s33, 7
      %p335 = por %p333, %p334
      %p337 = scmp.ne.s32.totalorder %s322, %s336
      %p338 = scmp.eq.s32.totalorder %s33, 0
      %p339 = por %p337, %p338
      %s340 = ssub.s32 %s34, %s46
      %p341 = scmp.eq.s32.totalorder %s340, 0
      %s343 = sadd.s32 %s342, 1
      %s344 = scalar_select %p341, %s342, %s343
      %p347 = pneg %p341
      %p348 = scmp.eq.s32.totalorder %s27, 7
      %p349 = por %p347, %p348
      %p350 = scmp.ne.s32.totalorder %s342, %s345
      %p351 = scmp.eq.s32.totalorder %s27, 0
      %p352 = por %p350, %p351
      %p353 = scmp.ne.s32.totalorder %s342, %s345
      %p354 = scmp.eq.s32.totalorder %s32, 7
      %p355 = por %p353, %p354
      %p356 = scmp.ne.s32.totalorder %s345, %s346
      %p357 = scmp.eq.s32.totalorder %s32, 0
      %p358 = por %p356, %p357
      %p359 = scmp.ne.s32.totalorder %s345, %s346
      %p360 = scmp.eq.s32.totalorder %s33, 7
      %p361 = por %p359, %p360
      %p363 = scmp.ne.s32.totalorder %s346, %s362
      %p364 = scmp.eq.s32.totalorder %s33, 0
      %p365 = por %p363, %p364
      %s366 = ssub.s32 %s34, %s46
      %s367 = ssub.s32 %s35, %s42
      %s368 = sor.u32 %s366, %s367
      %p369 = scmp.eq.s32.totalorder %s368, 0
      %s371 = sadd.s32 %s370, 1
      %s372 = scalar_select %p369, %s370, %s371
      %p375 = pneg %p369
      %p376 = scmp.eq.s32.totalorder %s27, 7
      %p377 = por %p375, %p376
      %p378 = scmp.ne.s32.totalorder %s370, %s373
      %p379 = scmp.eq.s32.totalorder %s27, 0
      %p380 = por %p378, %p379
      %p381 = scmp.ne.s32.totalorder %s370, %s373
      %p382 = scmp.eq.s32.totalorder %s32, 7
      %p383 = por %p381, %p382
      %p384 = scmp.ne.s32.totalorder %s373, %s374
      %p385 = scmp.eq.s32.totalorder %s32, 0
      %p386 = por %p384, %p385
      %p387 = scmp.ne.s32.totalorder %s373, %s374
      %p388 = scmp.eq.s32.totalorder %s33, 7
      %p389 = por %p387, %p388
      %p391 = scmp.ne.s32.totalorder %s374, %s390
      %p392 = scmp.eq.s32.totalorder %s33, 0
      %p393 = por %p391, %p392
      %p394 = scmp.le.s32.totalorder 1, %s27
      %p395 = scmp.lt.s32.totalorder %s27, 9
      %p396 = pnand %p394, %p395
      %p397 = pneg %p396
      // Predicated region
      $region9: #{tpu_custom_call.1} parent=5 // pred_check
        _
      $region10: #{tpu_custom_call.1} parent=5 // pred_check_branch
        %399 = sbr.rel (%p396) target = $region12
      $region11: #{tpu_custom_call.1} parent=5 // pred_region
        %s400 = ssub.s32 %s27, 1
        // Predicated region
        $region13: #{tpu_custom_call.1} parent=11 // pred_check
          %p401 = pneg %p164
        $region14: #{tpu_custom_call.1} parent=11 // pred_check_branch
          %403 = sbr.rel (%p401) target = $region16
        $region15: #{tpu_custom_call.1} parent=11 // pred_region
          _
        $region16: #{tpu_custom_call.1} parent=11 // pred_fallthru
          _
        // Predicated region
        $region17: #{tpu_custom_call.1} parent=11 // pred_check
          %p404 = pneg %p185
        $region18: #{tpu_custom_call.1} parent=11 // pred_check_branch
          %406 = sbr.rel (%p404) target = $region20
        $region19: #{tpu_custom_call.1} parent=11 // pred_region
          _
        $region20: #{tpu_custom_call.1} parent=11 // pred_fallthru
          _
        // Predicated region
        $region21: #{tpu_custom_call.1} parent=11 // pred_check
          %p407 = pneg %p206
        $region22: #{tpu_custom_call.1} parent=11 // pred_check_branch
          %409 = sbr.rel (%p407) target = $region24
        $region23: #{tpu_custom_call.1} parent=11 // pred_region
          _
        $region24: #{tpu_custom_call.1} parent=11 // pred_fallthru
          _
        // Predicated region
        $region25: #{tpu_custom_call.1} parent=11 // pred_check
          %p410 = pneg %p227
        $region26: #{tpu_custom_call.1} parent=11 // pred_check_branch
          %412 = sbr.rel (%p410) target = $region28
        $region27: #{tpu_custom_call.1} parent=11 // pred_region
          _
        $region28: #{tpu_custom_call.1} parent=11 // pred_fallthru
          _
        // Predicated region
        $region29: #{tpu_custom_call.1} parent=11 // pred_check
          %p413 = pneg %p248
        $region30: #{tpu_custom_call.1} parent=11 // pred_check_branch
          %415 = sbr.rel (%p413) target = $region32
        $region31: #{tpu_custom_call.1} parent=11 // pred_region
          _
        $region32: #{tpu_custom_call.1} parent=11 // pred_fallthru
          _
        // Predicated region
        $region33: #{tpu_custom_call.1} parent=11 // pred_check
          %p416 = pneg %p269
        $region34: #{tpu_custom_call.1} parent=11 // pred_check_branch
          %418 = sbr.rel (%p416) target = $region36
        $region35: #{tpu_custom_call.1} parent=11 // pred_region
          _
        $region36: #{tpu_custom_call.1} parent=11 // pred_fallthru
          _
        // Predicated region
        $region37: #{tpu_custom_call.1} parent=11 // pred_check
          %p419 = pneg %p290
        $region38: #{tpu_custom_call.1} parent=11 // pred_check_branch
          %421 = sbr.rel (%p419) target = $region40
        $region39: #{tpu_custom_call.1} parent=11 // pred_region
          _
        $region40: #{tpu_custom_call.1} parent=11 // pred_fallthru
          _
        // Predicated region
        $region41: #{tpu_custom_call.1} parent=11 // pred_check
          %p422 = pneg %p311
        $region42: #{tpu_custom_call.1} parent=11 // pred_check_branch
          %424 = sbr.rel (%p422) target = $region44
        $region43: #{tpu_custom_call.1} parent=11 // pred_region
          _
        $region44: #{tpu_custom_call.1} parent=11 // pred_fallthru
          _
        // Predicated region
        $region45: #{tpu_custom_call.1} parent=11 // pred_check
          %p425 = pneg %p332
        $region46: #{tpu_custom_call.1} parent=11 // pred_check_branch
          %427 = sbr.rel (%p425) target = $region48
        $region47: #{tpu_custom_call.1} parent=11 // pred_region
          _
        $region48: #{tpu_custom_call.1} parent=11 // pred_fallthru
          _
      $region12: #{tpu_custom_call.1} parent=5 // pred_fallthru
        _
      %p428 = scmp.lt.s32.totalorder %s27, 8
      // Predicated region
      $region49: #{tpu_custom_call.1} parent=5 // pred_check
        %p429 = pneg %p428
      $region50: #{tpu_custom_call.1} parent=5 // pred_check_branch
        %431 = sbr.rel (%p429) target = $region52
      $region51: #{tpu_custom_call.1} parent=5 // pred_region
        // Predicated region
        $region53: #{tpu_custom_call.1} parent=51 // pred_check
          %p432 = pneg %p59
        $region54: #{tpu_custom_call.1} parent=51 // pred_check_branch
          %434 = sbr.rel (%p432) target = $region56
        $region55: #{tpu_custom_call.1} parent=51 // pred_region
          %p435 = scmp.lt.s32.totalorder %s34, 1
          %s436 = scalar_select %p435, %s34, 1
          %s437 = smul.addr %s436, 8
          %s438 = scalar_lea.vmem %s0, %s437
        $region56: #{tpu_custom_call.1} parent=51 // pred_fallthru
          _
        // Predicated region
        $region57: #{tpu_custom_call.1} parent=51 // pred_check
          %p439 = pneg %p85
        $region58: #{tpu_custom_call.1} parent=51 // pred_check_branch
          %441 = sbr.rel (%p439) target = $region60
        $region59: #{tpu_custom_call.1} parent=51 // pred_region
          %s442 = sand.u32 %s75, 1
          %s443 = sand.u32 %s75, 1
          %s444 = smul.addr %s443, 96
          %s445 = scalar_lea.vmem [#allocation4], %s444
          %s446 = smul.addr %s35, 4
          %s447 = smul.addr %s446, 8
          %s448 = scalar_lea.vmem %s1, %s447
          // Predicated region
          $region61: #{tpu_custom_call.1} parent=59 // pred_check
            _
          $region62: #{tpu_custom_call.1} parent=59 // pred_check_branch
            %450 = sbr.rel (0) target = $region64
          $region63: #{tpu_custom_call.1} parent=59 // pred_region
            // Predicated region
            $region65: #{tpu_custom_call.1} parent=63 // pred_check
              _
            $region66: #{tpu_custom_call.1} parent=63 // pred_check_branch
              %452 = sbr.rel (0) target = $region68
            $region67: #{tpu_custom_call.1} parent=63 // pred_region
              // Predicated region
              $region80: #{tpu_custom_call.1} parent=67 // pred_check
                _
              $region81: #{tpu_custom_call.1} parent=67 // pred_check_branch
                %489 = sbr.rel (0) target = $region83
              $region82: #{tpu_custom_call.1} parent=67 // pred_region
                loop: start=0, step=1, limit=1
                $region84: #{tpu_custom_call.1} parent=82 // loop_pre_header
                  _
                $region85: #{tpu_custom_call.1} parent=82 // loop_header
                  %s491 = sphi 0, %s495
                  %p492 = scmp.ge.s32.totalorder %s491, 1
                  %s496 = sphi %s448, %s448
                  %s497 = sphi %s445, %s445
                $region86: #{tpu_custom_call.1} parent=82 // loop_header_branch
                  %494 = sbr.rel (%p492) target = $region90
                $region87: #{tpu_custom_call.1} parent=82 // loop_body
                  %v498 = vld [vmem:[%s496] sm:$0xff]
                  %499 = vst [vmem:[%s497] sm:$0xff] %v498
                  %v500 = vld [vmem:[%s496 + $0x8] sm:$0xff]
                  %501 = vst [vmem:[%s497 + $0x8] sm:$0xff] %v500
                  %v502 = vld [vmem:[%s496 + $0x10] sm:$0xff]
                  %503 = vst [vmem:[%s497 + $0x10] sm:$0xff] %v502
                  %v504 = vld [vmem:[%s496 + $0x18] sm:$0xff]
                  %505 = vst [vmem:[%s497 + $0x18] sm:$0xff] %v504
                  %v506 = vld [vmem:[%s496 + $0x80] sm:$0xff]
                  %507 = vst [vmem:[%s497 + $0x20] sm:$0xff] %v506
                  %v508 = vld [vmem:[%s496 + $0x88] sm:$0xff]
                  %509 = vst [vmem:[%s497 + $0x28] sm:$0xff] %v508
                  %v510 = vld [vmem:[%s496 + $0x90] sm:$0xff]
                  %511 = vst [vmem:[%s497 + $0x30] sm:$0xff] %v510
                  %v512 = vld [vmem:[%s496 + $0x98] sm:$0xff]
                  %513 = vst [vmem:[%s497 + $0x38] sm:$0xff] %v512
                  %v514 = vld [vmem:[%s496 + $0x100] sm:$0xff]
                  %515 = vst [vmem:[%s497 + $0x40] sm:$0xff] %v514
                  %v516 = vld [vmem:[%s496 + $0x108] sm:$0xff]
                  %517 = vst [vmem:[%s497 + $0x48] sm:$0xff] %v516
                  %v518 = vld [vmem:[%s496 + $0x110] sm:$0xff]
                  %519 = vst [vmem:[%s497 + $0x50] sm:$0xff] %v518
                  %v520 = vld [vmem:[%s496 + $0x118] sm:$0xff]
                  %521 = vst [vmem:[%s497 + $0x58] sm:$0xff] %v520
                $region88: #{tpu_custom_call.1} parent=82 // loop_footer
                  %s495 = sadd.s32 1, %s491
                $region89: #{tpu_custom_call.1} parent=82 // loop_footer_branch
                  %490 = sbr.rel target = $region85
                $region90: #{tpu_custom_call.1} parent=82 // loop_exit
                  _
              $region83: #{tpu_custom_call.1} parent=67 // pred_fallthru
                _
              // Predicated region
              $region91: #{tpu_custom_call.1} parent=67 // pred_check
                _
              $region92: #{tpu_custom_call.1} parent=67 // pred_check_branch
                %523 = sbr.rel target = $region94
              $region93: #{tpu_custom_call.1} parent=67 // pred_region
                _
              $region94: #{tpu_custom_call.1} parent=67 // pred_fallthru
                _
            $region68: #{tpu_custom_call.1} parent=63 // pred_fallthru
              _
            // Predicated region
            $region69: #{tpu_custom_call.1} parent=63 // pred_check
              _
            $region70: #{tpu_custom_call.1} parent=63 // pred_check_branch
              %454 = sbr.rel target = $region72
            $region71: #{tpu_custom_call.1} parent=63 // pred_region
              loop: start=0, step=1, limit=1
              $region73: #{tpu_custom_call.1} parent=71 // loop_pre_header
                _
              $region74: #{tpu_custom_call.1} parent=71 // loop_header
                %s457 = sphi 0, %s461
                %p458 = scmp.ge.s32.totalorder %s457, 1
                %s462 = sphi %s448, %s448
                %s463 = sphi %s445, %s445
              $region75: #{tpu_custom_call.1} parent=71 // loop_header_branch
                %460 = sbr.rel (%p458) target = $region79
              $region76: #{tpu_custom_call.1} parent=71 // loop_body
                %v464 = vld [vmem:[%s462] sm:$0xff]
                %465 = vst [vmem:[%s463] sm:$0xff] %v464
                %v466 = vld [vmem:[%s462 + $0x8] sm:$0xff]
                %467 = vst [vmem:[%s463 + $0x8] sm:$0xff] %v466
                %v468 = vld [vmem:[%s462 + $0x10] sm:$0xff]
                %469 = vst [vmem:[%s463 + $0x10] sm:$0xff] %v468
                %v470 = vld [vmem:[%s462 + $0x18] sm:$0xff]
                %471 = vst [vmem:[%s463 + $0x18] sm:$0xff] %v470
                %v472 = vld [vmem:[%s462 + $0x80] sm:$0xff]
                %473 = vst [vmem:[%s463 + $0x20] sm:$0xff] %v472
                %v474 = vld [vmem:[%s462 + $0x88] sm:$0xff]
                %475 = vst [vmem:[%s463 + $0x28] sm:$0xff] %v474
                %v476 = vld [vmem:[%s462 + $0x90] sm:$0xff]
                %477 = vst [vmem:[%s463 + $0x30] sm:$0xff] %v476
                %v478 = vld [vmem:[%s462 + $0x98] sm:$0xff]
                %479 = vst [vmem:[%s463 + $0x38] sm:$0xff] %v478
                %v480 = vld [vmem:[%s462 + $0x100] sm:$0xff]
                %481 = vst [vmem:[%s463 + $0x40] sm:$0xff] %v480
                %v482 = vld [vmem:[%s462 + $0x108] sm:$0xff]
                %483 = vst [vmem:[%s463 + $0x48] sm:$0xff] %v482
                %v484 = vld [vmem:[%s462 + $0x110] sm:$0xff]
                %485 = vst [vmem:[%s463 + $0x50] sm:$0xff] %v484
                %v486 = vld [vmem:[%s462 + $0x118] sm:$0xff]
                %487 = vst [vmem:[%s463 + $0x58] sm:$0xff] %v486
              $region77: #{tpu_custom_call.1} parent=71 // loop_footer
                %s461 = sadd.s32 1, %s457
              $region78: #{tpu_custom_call.1} parent=71 // loop_footer_branch
                %456 = sbr.rel target = $region74
              $region79: #{tpu_custom_call.1} parent=71 // loop_exit
                _
            $region72: #{tpu_custom_call.1} parent=63 // pred_fallthru
              _
          $region64: #{tpu_custom_call.1} parent=59 // pred_fallthru
            _
          %524 = vnop
        $region60: #{tpu_custom_call.1} parent=51 // pred_fallthru
          _
        // Predicated region
        $region95: #{tpu_custom_call.1} parent=51 // pred_check
          %p525 = pneg %p111
        $region96: #{tpu_custom_call.1} parent=51 // pred_check_branch
          %527 = sbr.rel (%p525) target = $region98
        $region97: #{tpu_custom_call.1} parent=51 // pred_region
          %s528 = sand.u32 %s101, 1
          %s529 = sand.u32 %s101, 1
          %s530 = smul.addr %s529, 3
          %s531 = scalar_lea.vmem [#allocation5], %s530
          %s532 = scalar_lea.vmem %s2, %s35
          // Predicated region
          $region99: #{tpu_custom_call.1} parent=97 // pred_check
            _
          $region100: #{tpu_custom_call.1} parent=97 // pred_check_branch
            %534 = sbr.rel (0) target = $region102
          $region101: #{tpu_custom_call.1} parent=97 // pred_region
            // Predicated region
            $region103: #{tpu_custom_call.1} parent=101 // pred_check
              _
            $region104: #{tpu_custom_call.1} parent=101 // pred_check_branch
              %536 = sbr.rel target = $region106
            $region105: #{tpu_custom_call.1} parent=101 // pred_region
              // Predicated region
              $region118: #{tpu_custom_call.1} parent=105 // pred_check
                _
              $region119: #{tpu_custom_call.1} parent=105 // pred_check_branch
                %555 = sbr.rel (0) target = $region121
              $region120: #{tpu_custom_call.1} parent=105 // pred_region
                loop: start=0, step=1, limit=1
                $region122: #{tpu_custom_call.1} parent=120 // loop_pre_header
                  _
                $region123: #{tpu_custom_call.1} parent=120 // loop_header
                  %s558 = sphi 0, %s562
                  %p559 = scmp.ge.s32.totalorder %s558, 1
                  %s563 = sphi %s532, %s532
                  %s564 = sphi %s531, %s531
                $region124: #{tpu_custom_call.1} parent=120 // loop_header_branch
                  %561 = sbr.rel (%p559) target = $region128
                $region125: #{tpu_custom_call.1} parent=120 // loop_body
                  %v565 = vld [vmem:[%s563] sm:$0x1]
                  %566 = vst [vmem:[%s564] sm:$0x1] %v565
                  %v567 = vld [vmem:[%s563 + $0x4] sm:$0x1]
                  %568 = vst [vmem:[%s564 + $0x1] sm:$0x1] %v567
                  %v569 = vld [vmem:[%s563 + $0x8] sm:$0x1]
                  %570 = vst [vmem:[%s564 + $0x2] sm:$0x1] %v569
                $region126: #{tpu_custom_call.1} parent=120 // loop_footer
                  %s562 = sadd.s32 1, %s558
                $region127: #{tpu_custom_call.1} parent=120 // loop_footer_branch
                  %557 = sbr.rel target = $region123
                $region128: #{tpu_custom_call.1} parent=120 // loop_exit
                  _
              $region121: #{tpu_custom_call.1} parent=105 // pred_fallthru
                _
            $region106: #{tpu_custom_call.1} parent=101 // pred_fallthru
              _
            // Predicated region
            $region107: #{tpu_custom_call.1} parent=101 // pred_check
              _
            $region108: #{tpu_custom_call.1} parent=101 // pred_check_branch
              %538 = sbr.rel (0) target = $region110
            $region109: #{tpu_custom_call.1} parent=101 // pred_region
              loop: start=0, step=1, limit=1
              $region111: #{tpu_custom_call.1} parent=109 // loop_pre_header
                _
              $region112: #{tpu_custom_call.1} parent=109 // loop_header
                %s541 = sphi 0, %s545
                %p542 = scmp.ge.s32.totalorder %s541, 1
                %s546 = sphi %s532, %s532
                %s547 = sphi %s531, %s531
              $region113: #{tpu_custom_call.1} parent=109 // loop_header_branch
                %544 = sbr.rel (%p542) target = $region117
              $region114: #{tpu_custom_call.1} parent=109 // loop_body
                %v548 = vld [vmem:[%s546] sm:$0x1]
                %549 = vst [vmem:[%s547] sm:$0x1] %v548
                %v550 = vld [vmem:[%s546 + $0x4] sm:$0x1]
                %551 = vst [vmem:[%s547 + $0x1] sm:$0x1] %v550
                %v552 = vld [vmem:[%s546 + $0x8] sm:$0x1]
                %553 = vst [vmem:[%s547 + $0x2] sm:$0x1] %v552
              $region115: #{tpu_custom_call.1} parent=109 // loop_footer
                %s545 = sadd.s32 1, %s541
              $region116: #{tpu_custom_call.1} parent=109 // loop_footer_branch
                %540 = sbr.rel target = $region112
              $region117: #{tpu_custom_call.1} parent=109 // loop_exit
                _
            $region110: #{tpu_custom_call.1} parent=101 // pred_fallthru
              _
          $region102: #{tpu_custom_call.1} parent=97 // pred_fallthru
            _
          %571 = vnop
        $region98: #{tpu_custom_call.1} parent=51 // pred_fallthru
          _
        // Predicated region
        $region129: #{tpu_custom_call.1} parent=51 // pred_check
          %p572 = pneg %p137
        $region130: #{tpu_custom_call.1} parent=51 // pred_check_branch
          %574 = sbr.rel (%p572) target = $region132
        $region131: #{tpu_custom_call.1} parent=51 // pred_region
          %p575 = scmp.lt.s32.totalorder %s35, 3
          %s576 = scalar_select %p575, %s35, 3
          %s577 = smul.addr %s576, 8
          %s578 = scalar_lea.vmem %s3, %s577
        $region132: #{tpu_custom_call.1} parent=51 // pred_fallthru
          _
      $region52: #{tpu_custom_call.1} parent=5 // pred_fallthru
        _
      %p579 = scmp.le.s32.totalorder 1, %s27
      %p580 = scmp.lt.s32.totalorder %s27, 9
      %p581 = pnand %p579, %p580
      %p582 = pneg %p581
      // Predicated region
      $region133: #{tpu_custom_call.1} parent=5 // pred_check
        _
      $region134: #{tpu_custom_call.1} parent=5 // pred_check_branch
        %584 = sbr.rel (%p581) target = $region136
      $region135: #{tpu_custom_call.1} parent=5 // pred_region
        %s585 = ssub.s32 %s27, 1
        %s586 = sand.u32 %s78, 1
        %s587 = sand.u32 %s78, 1
        %s588 = smul.addr %s587, 96
        %s589 = scalar_lea.vmem [#allocation4], %s588
        // Predicated region
        $region137: #{tpu_custom_call.1} parent=135 // pred_check
          %p590 = pneg %p91
        $region138: #{tpu_custom_call.1} parent=135 // pred_check_branch
          %592 = sbr.rel (%p590) target = $region140
        $region139: #{tpu_custom_call.1} parent=135 // pred_region
          _
        $region140: #{tpu_custom_call.1} parent=135 // pred_fallthru
          _
        %s593 = sand.u32 %s104, 1
        %s594 = sand.u32 %s104, 1
        %s595 = smul.addr %s594, 3
        %s596 = scalar_lea.vmem [#allocation5], %s595
        // Predicated region
        $region141: #{tpu_custom_call.1} parent=135 // pred_check
          %p597 = pneg %p117
        $region142: #{tpu_custom_call.1} parent=135 // pred_check_branch
          %599 = sbr.rel (%p597) target = $region144
        $region143: #{tpu_custom_call.1} parent=135 // pred_region
          _
        $region144: #{tpu_custom_call.1} parent=135 // pred_fallthru
          _
        %p600 = scmp.lt.s32.totalorder %s36, 1
        %s601 = scalar_select %p600, %s36, 1
        %s602 = smul.addr %s601, 8
        %s603 = scalar_lea.vmem %s0, %s602
        %p604 = pneg %p65
        %p605 = pneg %p62
        %s606 = sand.u32 %s78, 1
        %s607 = sand.u32 %s78, 1
        %s608 = smul.addr %s607, 96
        %s609 = scalar_lea.vmem [#allocation4], %s608
        %p610 = pneg %p91
        %p611 = pneg %p88
        %s612 = sand.u32 %s104, 1
        %s613 = sand.u32 %s104, 1
        %s614 = smul.addr %s613, 3
        %s615 = scalar_lea.vmem [#allocation5], %s614
        %p616 = pneg %p117
        %p617 = pneg %p114
        %p618 = scmp.lt.s32.totalorder %s37, 3
        %s619 = scalar_select %p618, %s37, 3
        %s620 = smul.addr %s619, 8
        %s621 = scalar_lea.vmem %s3, %s620
        %p622 = pneg %p143
        %p623 = pneg %p140
        %p624 = pneg %p164
        %p625 = pneg %p161
        %p626 = pneg %p185
        %p627 = pneg %p182
        %p628 = pneg %p206
        %p629 = pneg %p203
        %p630 = pneg %p227
        %p631 = pneg %p224
        %p632 = pneg %p248
        %p633 = pneg %p245
        %p634 = pneg %p269
        %p635 = pneg %p266
        %p636 = pneg %p290
        %p637 = pneg %p287
        %p638 = pneg %p311
        %p639 = pneg %p308
        %p640 = pneg %p332
        %p641 = pneg %p329
        %p642 = pneg %p358
        %p643 = pneg %p355
        %s644 = sand.u32 %s345, 1
        %s645 = scalar_lea.sflag [#allocation7], %s644
        %s646 = sand.u32 %s345, 1
        %s647 = smul.addr %s646, 8
        %s648 = scalar_lea.vmem [#allocation6], %s647
        %p649 = pneg %p386
        %p650 = pneg %p383
        %s651 = sand.u32 %s373, 1
        %s652 = scalar_lea.sflag [#allocation9], %s651
        %s653 = sand.u32 %s373, 1
        %s654 = smul.addr %s653, 8
        %s655 = scalar_lea.vmem [#allocation8], %s654
        %p656 = scmp.lt.s32.totalorder %s36, 1
        %s657 = scalar_select %p656, %s36, 1
        %s658 = smul.addr %s657, 8
        %s659 = scalar_lea.vmem %s0, %s658
        %p660 = scmp.lt.s32.totalorder %s37, 3
        %s661 = scalar_select %p660, %s37, 3
        %s662 = smul.addr %s661, 8
        %s663 = scalar_lea.vmem %s3, %s662
        %p664 = scmp.eq.s32.totalorder %s37, 0
        // Predicated region
        $region145: #{tpu_custom_call.1} parent=135 // pred_check
          %p665 = pneg %p664
        $region146: #{tpu_custom_call.1} parent=135 // pred_check_branch
          %667 = sbr.rel (%p665) target = $region148
        $region147: #{tpu_custom_call.1} parent=135 // pred_region
          %v668 = vld [vmem:[%s659] sm:$0xff]
          %vm669 = vcmask 261120
          %v670 = vsel %vm669, %v668, 0.0
          %671 = vadd.xlane.f32.xlu0 %v670
          %v672 = vpop.xlane.xlu0 %671
          %v673 = vrcp.pop 32.0
          %v674 = vmul.f32 %v672, %v673
          %v675 = vsub.f32 %v668, %v674
          %v676 = vmul.f32 %v675, %v675
          %v677 = vsel %vm669, %v676, 0.0
          %678 = vadd.xlane.f32.xlu0 %v677
          %v679 = vpop.xlane.xlu0 %678
          %v680 = vmul.f32 %v679, %v673
          %v681 = vadd.f32 %v680, 1e-05
          %v682 = vrsqrt.pop %v681
          %v683 = vmul.f32 %v675, %v682
          %v684 = vld [vmem:[%s5] sm:$0x1]
          %v686 = vlaneseq
          %v687 = vshrl.u32 %v686, 7
          %v688 = vsub.s32 0, %v687
          %v689 = vrot.slane %v684, %v688
          %v691 = vmul.f32 %v683, %v689
          %v692 = vld [vmem:[%s6] sm:$0x1]
          %v694 = vlaneseq
          %v695 = vshrl.u32 %v694, 7
          %v696 = vsub.s32 0, %v695
          %v697 = vrot.slane %v692, %v696
          %v699 = vadd.f32 %v691, %v697
          %700 = vst.msk [vmem:[#allocation2] sm:$0xff] %vm669, %v699
          %701 = vst.msk [vmem:[#allocation3] sm:$0xff] %vm669, 0.0
        $region148: #{tpu_custom_call.1} parent=135 // pred_fallthru
          _
        %v702 = vld [vmem:[#allocation2] sm:$0xff]
        %v703 = vld [vmem:[%s589] sm:$0xff]
        %v704 = vld [vmem:[%s589 + $0x8] sm:$0xff]
        %v705 = vld [vmem:[%s589 + $0x10] sm:$0xff]
        %v706 = vld [vmem:[%s589 + $0x18] sm:$0xff]
        %v707 = vld [vmem:[%s596] sm:$0x1]
        %v709 = vlaneseq
        %v710 = vshrl.u32 %v709, 7
        %v711 = vsub.s32 0, %v710
        %v712 = vrot.slane %v707, %v711
        %vm714 = vcmask 261120
        %v716 = vsel %vm714, %v702, 0
        %718 = vmatprep.subr.mxu0 0.0
        %719 = vmatpush1.msra.mxu0 %v703
        %720 = vmatprep.subr.mxu0 0.0
        %721 = vmatpush1.msra.mxu0 %v704
        %722 = vmatprep.subr.mxu0 0.0
        %723 = vmatpush1.msra.mxu0 %v705
        %724 = vmatprep.subr.mxu0 0.0
        %725 = vmatpush1.msra.mxu0 %v706
        %726 = vmatprep.subr.mxu0 0.0
        %727 = vmatpush1.msra.mxu0 0.0
        %728 = vmatprep.subr.mxu0 0.0
        %729 = vmatpush1.msra.mxu0 0.0
        %730 = vmatprep.subr.mxu0 0.0
        %731 = vmatpush1.msra.mxu0 0.0
        %732 = vmatprep.subr.mxu0 0.0
        %733 = vmatpush1.msra.mxu0 0.0
        %734 = vmatprep.subr.mxu0 0.0
        %735 = vmatpush1.msra.mxu0 0.0
        %736 = vmatprep.subr.mxu0 0.0
        %737 = vmatpush1.msra.mxu0 0.0
        %738 = vmatprep.subr.mxu0 0.0
        %739 = vmatpush1.msra.mxu0 0.0
        %740 = vmatprep.subr.mxu0 0.0
        %741 = vmatpush1.msra.mxu0 0.0
        %742 = vmatprep.subr.mxu0 0.0
        %743 = vmatpush1.msra.mxu0 0.0
        %744 = vmatprep.subr.mxu0 0.0
        %745 = vmatpush1.msra.mxu0 0.0
        %746 = vmatprep.subr.mxu0 0.0
        %747 = vmatpush1.msra.mxu0 0.0
        %748 = vmatprep.subr.mxu0 0.0
        %749 = vmatpush1.msra.mxu0 0.0
        %750 = vmatprep.subr.mxu0 0.0
        %751 = vmatpush1.msra.mxu0 0.0
        %752 = vmatprep.subr.mxu0 0.0
        %753 = vmatpush1.msra.mxu0 0.0
        %754 = vmatprep.subr.mxu0 0.0
        %755 = vmatpush1.msra.mxu0 0.0
        %756 = vmatprep.subr.mxu0 0.0
        %757 = vmatpush1.msra.mxu0 0.0
        %758 = vmatprep.subr.mxu0 0.0
        %759 = vmatpush1.msra.mxu0 0.0
        %760 = vmatprep.subr.mxu0 0.0
        %761 = vmatpush1.msra.mxu0 0.0
        %762 = vmatprep.subr.mxu0 0.0
        %763 = vmatpush1.msra.mxu0 0.0
        %764 = vmatprep.subr.mxu0 0.0
        %765 = vmatpush1.msra.mxu0 0.0
        %766 = vmatprep.subr.mxu0 0.0
        %767 = vmatpush1.msra.mxu0 0.0
        %768 = vmatprep.subr.mxu0 0.0
        %769 = vmatpush1.msra.mxu0 0.0
        %770 = vmatprep.subr.mxu0 0.0
        %771 = vmatpush1.msra.mxu0 0.0
        %772 = vmatprep.subr.mxu0 0.0
        %773 = vmatpush1.msra.mxu0 0.0
        %774 = vmatprep.subr.mxu0 0.0
        %775 = vmatpush1.msra.mxu0 0.0
        %776 = vmatprep.subr.mxu0 0.0
        %777 = vmatpush1.msra.mxu0 0.0
        %778 = vmatprep.subr.mxu0 0.0
        %779 = vmatpush1.msra.mxu0 0.0
        %780 = vmatprep.subr.mxu0 0.0
        %781 = vmatpush1.msra.mxu0 0.0
        %782 = vmatprep.mubr.f32.mxu0 0.0
        %783 = vmatmul.mubr.f32.gmra.mrb[0].mxu0 %v716
        %v784 = vpop.f32.mrb[0].mxu0
        %v785 = vadd.f32 %v712, %v784
        %v786 = vpop.f32.mrb[0].mxu0
        %787 = vdwg.mxu0
        %s788 = scalar_lea.vmem %s589, 32 [#allocation4]
        %v789 = vld [vmem:[%s788] sm:$0xff]
        %v790 = vld [vmem:[%s788 + $0x8] sm:$0xff]
        %v791 = vld [vmem:[%s788 + $0x10] sm:$0xff]
        %v792 = vld [vmem:[%s788 + $0x18] sm:$0xff]
        %s793 = scalar_lea.vmem %s596, 1 [#allocation5]
        %v794 = vld [vmem:[%s793] sm:$0x1]
        %v796 = vlaneseq
        %v797 = vshrl.u32 %v796, 7
        %v798 = vsub.s32 0, %v797
        %v799 = vrot.slane %v794, %v798
        %801 = vmatprep.subr.mxu0 0.0
        %802 = vmatpush1.msra.mxu0 %v789
        %803 = vmatprep.subr.mxu0 0.0
        %804 = vmatpush1.msra.mxu0 %v790
        %805 = vmatprep.subr.mxu0 0.0
        %806 = vmatpush1.msra.mxu0 %v791
        %807 = vmatprep.subr.mxu0 0.0
        %808 = vmatpush1.msra.mxu0 %v792
        %809 = vmatprep.subr.mxu0 0.0
        %810 = vmatpush1.msra.mxu0 0.0
        %811 = vmatprep.subr.mxu0 0.0
        %812 = vmatpush1.msra.mxu0 0.0
        %813 = vmatprep.subr.mxu0 0.0
        %814 = vmatpush1.msra.mxu0 0.0
        %815 = vmatprep.subr.mxu0 0.0
        %816 = vmatpush1.msra.mxu0 0.0
        %817 = vmatprep.subr.mxu0 0.0
        %818 = vmatpush1.msra.mxu0 0.0
        %819 = vmatprep.subr.mxu0 0.0
        %820 = vmatpush1.msra.mxu0 0.0
        %821 = vmatprep.subr.mxu0 0.0
        %822 = vmatpush1.msra.mxu0 0.0
        %823 = vmatprep.subr.mxu0 0.0
        %824 = vmatpush1.msra.mxu0 0.0
        %825 = vmatprep.subr.mxu0 0.0
        %826 = vmatpush1.msra.mxu0 0.0
        %827 = vmatprep.subr.mxu0 0.0
        %828 = vmatpush1.msra.mxu0 0.0
        %829 = vmatprep.subr.mxu0 0.0
        %830 = vmatpush1.msra.mxu0 0.0
        %831 = vmatprep.subr.mxu0 0.0
        %832 = vmatpush1.msra.mxu0 0.0
        %833 = vmatprep.subr.mxu0 0.0
        %834 = vmatpush1.msra.mxu0 0.0
        %835 = vmatprep.subr.mxu0 0.0
        %836 = vmatpush1.msra.mxu0 0.0
        %837 = vmatprep.subr.mxu0 0.0
        %838 = vmatpush1.msra.mxu0 0.0
        %839 = vmatprep.subr.mxu0 0.0
        %840 = vmatpush1.msra.mxu0 0.0
        %841 = vmatprep.subr.mxu0 0.0
        %842 = vmatpush1.msra.mxu0 0.0
        %843 = vmatprep.subr.mxu0 0.0
        %844 = vmatpush1.msra.mxu0 0.0
        %845 = vmatprep.subr.mxu0 0.0
        %846 = vmatpush1.msra.mxu0 0.0
        %847 = vmatprep.subr.mxu0 0.0
        %848 = vmatpush1.msra.mxu0 0.0
        %849 = vmatprep.subr.mxu0 0.0
        %850 = vmatpush1.msra.mxu0 0.0
        %851 = vmatprep.subr.mxu0 0.0
        %852 = vmatpush1.msra.mxu0 0.0
        %853 = vmatprep.subr.mxu0 0.0
        %854 = vmatpush1.msra.mxu0 0.0
        %855 = vmatprep.subr.mxu0 0.0
        %856 = vmatpush1.msra.mxu0 0.0
        %857 = vmatprep.subr.mxu0 0.0
        %858 = vmatpush1.msra.mxu0 0.0
        %859 = vmatprep.subr.mxu0 0.0
        %860 = vmatpush1.msra.mxu0 0.0
        %861 = vmatprep.subr.mxu0 0.0
        %862 = vmatpush1.msra.mxu0 0.0
        %863 = vmatprep.subr.mxu0 0.0
        %864 = vmatpush1.msra.mxu0 0.0
        %865 = vmatprep.mubr.f32.mxu0 0.0
        %866 = vmatmul.mubr.f32.gmra.mrb[0].mxu0 %v716
        %v867 = vpop.f32.mrb[0].mxu0
        %v868 = vadd.f32 %v799, %v867
        %v869 = vpop.f32.mrb[0].mxu0
        %870 = vdwg.mxu0
        %s871 = scalar_lea.vmem %s589, 64 [#allocation4]
        %v872 = vld [vmem:[%s871] sm:$0xff]
        %v873 = vld [vmem:[%s871 + $0x8] sm:$0xff]
        %v874 = vld [vmem:[%s871 + $0x10] sm:$0xff]
        %v875 = vld [vmem:[%s871 + $0x18] sm:$0xff]
        %s876 = scalar_lea.vmem %s596, 2 [#allocation5]
        %v877 = vld [vmem:[%s876] sm:$0x1]
        %v879 = vlaneseq
        %v880 = vshrl.u32 %v879, 7
        %v881 = vsub.s32 0, %v880
        %v882 = vrot.slane %v877, %v881
        %884 = vmatprep.subr.mxu0 0.0
        %885 = vmatpush1.msra.mxu0 %v872
        %886 = vmatprep.subr.mxu0 0.0
        %887 = vmatpush1.msra.mxu0 %v873
        %888 = vmatprep.subr.mxu0 0.0
        %889 = vmatpush1.msra.mxu0 %v874
        %890 = vmatprep.subr.mxu0 0.0
        %891 = vmatpush1.msra.mxu0 %v875
        %892 = vmatprep.subr.mxu0 0.0
        %893 = vmatpush1.msra.mxu0 0.0
        %894 = vmatprep.subr.mxu0 0.0
        %895 = vmatpush1.msra.mxu0 0.0
        %896 = vmatprep.subr.mxu0 0.0
        %897 = vmatpush1.msra.mxu0 0.0
        %898 = vmatprep.subr.mxu0 0.0
        %899 = vmatpush1.msra.mxu0 0.0
        %900 = vmatprep.subr.mxu0 0.0
        %901 = vmatpush1.msra.mxu0 0.0
        %902 = vmatprep.subr.mxu0 0.0
        %903 = vmatpush1.msra.mxu0 0.0
        %904 = vmatprep.subr.mxu0 0.0
        %905 = vmatpush1.msra.mxu0 0.0
        %906 = vmatprep.subr.mxu0 0.0
        %907 = vmatpush1.msra.mxu0 0.0
        %908 = vmatprep.subr.mxu0 0.0
        %909 = vmatpush1.msra.mxu0 0.0
        %910 = vmatprep.subr.mxu0 0.0
        %911 = vmatpush1.msra.mxu0 0.0
        %912 = vmatprep.subr.mxu0 0.0
        %913 = vmatpush1.msra.mxu0 0.0
        %914 = vmatprep.subr.mxu0 0.0
        %915 = vmatpush1.msra.mxu0 0.0
        %916 = vmatprep.subr.mxu0 0.0
        %917 = vmatpush1.msra.mxu0 0.0
        %918 = vmatprep.subr.mxu0 0.0
        %919 = vmatpush1.msra.mxu0 0.0
        %920 = vmatprep.subr.mxu0 0.0
        %921 = vmatpush1.msra.mxu0 0.0
        %922 = vmatprep.subr.mxu0 0.0
        %923 = vmatpush1.msra.mxu0 0.0
        %924 = vmatprep.subr.mxu0 0.0
        %925 = vmatpush1.msra.mxu0 0.0
        %926 = vmatprep.subr.mxu0 0.0
        %927 = vmatpush1.msra.mxu0 0.0
        %928 = vmatprep.subr.mxu0 0.0
        %929 = vmatpush1.msra.mxu0 0.0
        %930 = vmatprep.subr.mxu0 0.0
        %931 = vmatpush1.msra.mxu0 0.0
        %932 = vmatprep.subr.mxu0 0.0
        %933 = vmatpush1.msra.mxu0 0.0
        %934 = vmatprep.subr.mxu0 0.0
        %935 = vmatpush1.msra.mxu0 0.0
        %936 = vmatprep.subr.mxu0 0.0
        %937 = vmatpush1.msra.mxu0 0.0
        %938 = vmatprep.subr.mxu0 0.0
        %939 = vmatpush1.msra.mxu0 0.0
        %940 = vmatprep.subr.mxu0 0.0
        %941 = vmatpush1.msra.mxu0 0.0
        %942 = vmatprep.subr.mxu0 0.0
        %943 = vmatpush1.msra.mxu0 0.0
        %944 = vmatprep.subr.mxu0 0.0
        %945 = vmatpush1.msra.mxu0 0.0
        %946 = vmatprep.subr.mxu0 0.0
        %947 = vmatpush1.msra.mxu0 0.0
        %948 = vmatprep.mubr.f32.mxu0 0.0
        %949 = vmatmul.mubr.f32.gmra.mrb[0].mxu0 %v716
        %v950 = vpop.f32.mrb[0].mxu0
        %v951 = vadd.f32 %v882, %v950
        %v952 = vpop.f32.mrb[0].mxu0
        %953 = vdwg.mxu0
        %vm954 = vcmask 64512
        %v956 = vsel %vm954, %v785, 0
        %v959 = vsel %vm954, %v868, 0
        %961 = vmatprep.subr.mxu0 0.0
        %962 = vmatpush1.xpose.msra.mxu0 %v959
        %963 = vmatprep.subr.mxu0 0.0
        %964 = vmatpush1.xpose.msra.mxu0 0.0
        %965 = vmatprep.subr.mxu0 0.0
        %966 = vmatpush1.xpose.msra.mxu0 0.0
        %967 = vmatprep.subr.mxu0 0.0
        %968 = vmatpush1.xpose.msra.mxu0 0.0
        %969 = vmatprep.subr.mxu0 0.0
        %970 = vmatpush1.xpose.msra.mxu0 0.0
        %971 = vmatprep.subr.mxu0 0.0
        %972 = vmatpush1.xpose.msra.mxu0 0.0
        %973 = vmatprep.subr.mxu0 0.0
        %974 = vmatpush1.xpose.msra.mxu0 0.0
        %975 = vmatprep.subr.mxu0 0.0
        %976 = vmatpush1.xpose.msra.mxu0 0.0
        %977 = vmatprep.subr.mxu0 0.0
        %978 = vmatpush1.xpose.msra.mxu0 0.0
        %979 = vmatprep.subr.mxu0 0.0
        %980 = vmatpush1.xpose.msra.mxu0 0.0
        %981 = vmatprep.subr.mxu0 0.0
        %982 = vmatpush1.xpose.msra.mxu0 0.0
        %983 = vmatprep.subr.mxu0 0.0
        %984 = vmatpush1.xpose.msra.mxu0 0.0
        %985 = vmatprep.subr.mxu0 0.0
        %986 = vmatpush1.xpose.msra.mxu0 0.0
        %987 = vmatprep.subr.mxu0 0.0
        %988 = vmatpush1.xpose.msra.mxu0 0.0
        %989 = vmatprep.subr.mxu0 0.0
        %990 = vmatpush1.xpose.msra.mxu0 0.0
        %991 = vmatprep.subr.mxu0 0.0
        %992 = vmatpush1.xpose.msra.mxu0 0.0
        %993 = vmatprep.subr.mxu0 0.0
        %994 = vmatpush1.xpose.msra.mxu0 0.0
        %995 = vmatprep.subr.mxu0 0.0
        %996 = vmatpush1.xpose.msra.mxu0 0.0
        %997 = vmatprep.subr.mxu0 0.0
        %998 = vmatpush1.xpose.msra.mxu0 0.0
        %999 = vmatprep.subr.mxu0 0.0
        %1000 = vmatpush1.xpose.msra.mxu0 0.0
        %1001 = vmatprep.subr.mxu0 0.0
        %1002 = vmatpush1.xpose.msra.mxu0 0.0
        %1003 = vmatprep.subr.mxu0 0.0
        %1004 = vmatpush1.xpose.msra.mxu0 0.0
        %1005 = vmatprep.subr.mxu0 0.0
        %1006 = vmatpush1.xpose.msra.mxu0 0.0
        %1007 = vmatprep.subr.mxu0 0.0
        %1008 = vmatpush1.xpose.msra.mxu0 0.0
        %1009 = vmatprep.subr.mxu0 0.0
        %1010 = vmatpush1.xpose.msra.mxu0 0.0
        %1011 = vmatprep.subr.mxu0 0.0
        %1012 = vmatpush1.xpose.msra.mxu0 0.0
        %1013 = vmatprep.subr.mxu0 0.0
        %1014 = vmatpush1.xpose.msra.mxu0 0.0
        %1015 = vmatprep.subr.mxu0 0.0
        %1016 = vmatpush1.xpose.msra.mxu0 0.0
        %1017 = vmatprep.subr.mxu0 0.0
        %1018 = vmatpush1.xpose.msra.mxu0 0.0
        %1019 = vmatprep.subr.mxu0 0.0
        %1020 = vmatpush1.xpose.msra.mxu0 0.0
        %1021 = vmatprep.subr.mxu0 0.0
        %1022 = vmatpush1.xpose.msra.mxu0 0.0
        %1023 = vmatprep.subr.mxu0 0.0
        %1024 = vmatpush1.xpose.msra.mxu0 0.0
        %1025 = vmatprep.mubr.f32.mxu0 0.0
        %1026 = vmatmul.mubr.f32.gmra.mrb[0].mxu0 %v956
        %v1027 = vpop.f32.mrb[0].mxu0
        %v1028 = vadd.f32 0.0, %v1027
        %v1029 = vpop.f32.mrb[0].mxu0
        %1030 = vdwg.mxu0
        %v1031 = vmul.f32 %v1028, 0.35355338
        %v1032 = vsel %vm954, %v1031, -inf
        %1033 = vmax.xlane.f32.xlu0 %v1032
        %v1034 = vpop.xlane.xlu0 %1033
        %v1035 = vsub.f32 %v1031, %v1034
        %v1036 = vmul.f32 %v1035, 1.442695
        %v1037 = vpow.pop %v1036
        %v1038 = vsel %vm954, %v1037, 0.0
        %1039 = vadd.xlane.f32.xlu0 %v1038
        %v1040 = vpop.xlane.xlu0 %1039
        %v1041 = vrcp.pop %v1040
        %v1042 = vmul.f32 %v1037, %v1041
        %1043 = vst.msk [vmem:[%s655] sm:$0xff] %vm954, %v1042
        %v1045 = vsel %vm954, %v1042, 0
        %1047 = vmatprep.subr.mxu0 0.0
        %1048 = vmatpush1.msra.mxu0 %v951
        %1049 = vmatprep.subr.mxu0 0.0
        %1050 = vmatpush1.msra.mxu0 0.0
        %1051 = vmatprep.subr.mxu0 0.0
        %1052 = vmatpush1.msra.mxu0 0.0
        %1053 = vmatprep.subr.mxu0 0.0
        %1054 = vmatpush1.msra.mxu0 0.0
        %1055 = vmatprep.subr.mxu0 0.0
        %1056 = vmatpush1.msra.mxu0 0.0
        %1057 = vmatprep.subr.mxu0 0.0
        %1058 = vmatpush1.msra.mxu0 0.0
        %1059 = vmatprep.subr.mxu0 0.0
        %1060 = vmatpush1.msra.mxu0 0.0
        %1061 = vmatprep.subr.mxu0 0.0
        %1062 = vmatpush1.msra.mxu0 0.0
        %1063 = vmatprep.subr.mxu0 0.0
        %1064 = vmatpush1.msra.mxu0 0.0
        %1065 = vmatprep.subr.mxu0 0.0
        %1066 = vmatpush1.msra.mxu0 0.0
        %1067 = vmatprep.subr.mxu0 0.0
        %1068 = vmatpush1.msra.mxu0 0.0
        %1069 = vmatprep.subr.mxu0 0.0
        %1070 = vmatpush1.msra.mxu0 0.0
        %1071 = vmatprep.subr.mxu0 0.0
        %1072 = vmatpush1.msra.mxu0 0.0
        %1073 = vmatprep.subr.mxu0 0.0
        %1074 = vmatpush1.msra.mxu0 0.0
        %1075 = vmatprep.subr.mxu0 0.0
        %1076 = vmatpush1.msra.mxu0 0.0
        %1077 = vmatprep.subr.mxu0 0.0
        %1078 = vmatpush1.msra.mxu0 0.0
        %1079 = vmatprep.subr.mxu0 0.0
        %1080 = vmatpush1.msra.mxu0 0.0
        %1081 = vmatprep.subr.mxu0 0.0
        %1082 = vmatpush1.msra.mxu0 0.0
        %1083 = vmatprep.subr.mxu0 0.0
        %1084 = vmatpush1.msra.mxu0 0.0
        %1085 = vmatprep.subr.mxu0 0.0
        %1086 = vmatpush1.msra.mxu0 0.0
        %1087 = vmatprep.subr.mxu0 0.0
        %1088 = vmatpush1.msra.mxu0 0.0
        %1089 = vmatprep.subr.mxu0 0.0
        %1090 = vmatpush1.msra.mxu0 0.0
        %1091 = vmatprep.subr.mxu0 0.0
        %1092 = vmatpush1.msra.mxu0 0.0
        %1093 = vmatprep.subr.mxu0 0.0
        %1094 = vmatpush1.msra.mxu0 0.0
        %1095 = vmatprep.subr.mxu0 0.0
        %1096 = vmatpush1.msra.mxu0 0.0
        %1097 = vmatprep.subr.mxu0 0.0
        %1098 = vmatpush1.msra.mxu0 0.0
        %1099 = vmatprep.subr.mxu0 0.0
        %1100 = vmatpush1.msra.mxu0 0.0
        %1101 = vmatprep.subr.mxu0 0.0
        %1102 = vmatpush1.msra.mxu0 0.0
        %1103 = vmatprep.subr.mxu0 0.0
        %1104 = vmatpush1.msra.mxu0 0.0
        %1105 = vmatprep.subr.mxu0 0.0
        %1106 = vmatpush1.msra.mxu0 0.0
        %1107 = vmatprep.subr.mxu0 0.0
        %1108 = vmatpush1.msra.mxu0 0.0
        %1109 = vmatprep.subr.mxu0 0.0
        %1110 = vmatpush1.msra.mxu0 0.0
        %1111 = vmatprep.mubr.f32.mxu0 0.0
        %1112 = vmatmul.mubr.f32.gmra.mrb[0].mxu0 %v1045
        %v1113 = vpop.f32.mrb[0].mxu0
        %v1114 = vadd.f32 0.0, %v1113
        %v1115 = vpop.f32.mrb[0].mxu0
        %1116 = vdwg.mxu0
        %v1117 = vld [vmem:[#allocation3] sm:$0xff]
        %v1118 = vld [vmem:[%s663] sm:$0xff]
        %v1120 = vsel %vm954, %v1114, 0
        %1122 = vmatprep.subr.mxu0 0.0
        %1123 = vmatpush1.msra.mxu0 %v1118
        %1124 = vmatprep.subr.mxu0 0.0
        %1125 = vmatpush1.msra.mxu0 0.0
        %1126 = vmatprep.subr.mxu0 0.0
        %1127 = vmatpush1.msra.mxu0 0.0
        %1128 = vmatprep.subr.mxu0 0.0
        %1129 = vmatpush1.msra.mxu0 0.0
        %1130 = vmatprep.subr.mxu0 0.0
        %1131 = vmatpush1.msra.mxu0 0.0
        %1132 = vmatprep.subr.mxu0 0.0
        %1133 = vmatpush1.msra.mxu0 0.0
        %1134 = vmatprep.subr.mxu0 0.0
        %1135 = vmatpush1.msra.mxu0 0.0
        %1136 = vmatprep.subr.mxu0 0.0
        %1137 = vmatpush1.msra.mxu0 0.0
        %1138 = vmatprep.subr.mxu0 0.0
        %1139 = vmatpush1.msra.mxu0 0.0
        %1140 = vmatprep.subr.mxu0 0.0
        %1141 = vmatpush1.msra.mxu0 0.0
        %1142 = vmatprep.subr.mxu0 0.0
        %1143 = vmatpush1.msra.mxu0 0.0
        %1144 = vmatprep.subr.mxu0 0.0
        %1145 = vmatpush1.msra.mxu0 0.0
        %1146 = vmatprep.subr.mxu0 0.0
        %1147 = vmatpush1.msra.mxu0 0.0
        %1148 = vmatprep.subr.mxu0 0.0
        %1149 = vmatpush1.msra.mxu0 0.0
        %1150 = vmatprep.subr.mxu0 0.0
        %1151 = vmatpush1.msra.mxu0 0.0
        %1152 = vmatprep.subr.mxu0 0.0
        %1153 = vmatpush1.msra.mxu0 0.0
        %1154 = vmatprep.subr.mxu0 0.0
        %1155 = vmatpush1.msra.mxu0 0.0
        %1156 = vmatprep.subr.mxu0 0.0
        %1157 = vmatpush1.msra.mxu0 0.0
        %1158 = vmatprep.subr.mxu0 0.0
        %1159 = vmatpush1.msra.mxu0 0.0
        %1160 = vmatprep.subr.mxu0 0.0
        %1161 = vmatpush1.msra.mxu0 0.0
        %1162 = vmatprep.subr.mxu0 0.0
        %1163 = vmatpush1.msra.mxu0 0.0
        %1164 = vmatprep.subr.mxu0 0.0
        %1165 = vmatpush1.msra.mxu0 0.0
        %1166 = vmatprep.subr.mxu0 0.0
        %1167 = vmatpush1.msra.mxu0 0.0
        %1168 = vmatprep.subr.mxu0 0.0
        %1169 = vmatpush1.msra.mxu0 0.0
        %1170 = vmatprep.subr.mxu0 0.0
        %1171 = vmatpush1.msra.mxu0 0.0
        %1172 = vmatprep.subr.mxu0 0.0
        %1173 = vmatpush1.msra.mxu0 0.0
        %1174 = vmatprep.subr.mxu0 0.0
        %1175 = vmatpush1.msra.mxu0 0.0
        %1176 = vmatprep.subr.mxu0 0.0
        %1177 = vmatpush1.msra.mxu0 0.0
        %1178 = vmatprep.subr.mxu0 0.0
        %1179 = vmatpush1.msra.mxu0 0.0
        %1180 = vmatprep.subr.mxu0 0.0
        %1181 = vmatpush1.msra.mxu0 0.0
        %1182 = vmatprep.subr.mxu0 0.0
        %1183 = vmatpush1.msra.mxu0 0.0
        %1184 = vmatprep.subr.mxu0 0.0
        %1185 = vmatpush1.msra.mxu0 0.0
        %1186 = vmatprep.mubr.f32.mxu0 0.0
        %1187 = vmatmul.mubr.f32.gmra.mrb[0].mxu0 %v1120
        %v1188 = vpop.f32.mrb[0].mxu0
        %v1189 = vadd.f32 0.0, %v1188
        %v1190 = vpop.f32.mrb[0].mxu0
        %1191 = vdwg.mxu0
        %v1192 = vadd.f32 %v1117, %v1189
        %1193 = vst.msk [vmem:[#allocation3] sm:$0xff] %vm714, %v1192
        %p1194 = scmp.eq.s32.totalorder %s37, 3
        // Predicated region
        $region149: #{tpu_custom_call.1} parent=135 // pred_check
          %p1195 = pneg %p1194
        $region150: #{tpu_custom_call.1} parent=135 // pred_check_branch
          %1197 = sbr.rel (%p1195) target = $region152
        $region151: #{tpu_custom_call.1} parent=135 // pred_region
          %v1198 = vld [vmem:[%s659] sm:$0xff]
          %v1199 = vld [vmem:[#allocation3] sm:$0xff]
          %v1200 = vadd.f32 %v1198, %v1199
          %v1201 = vld [vmem:[%s4] sm:$0x1]
          %v1203 = vlaneseq
          %v1204 = vshrl.u32 %v1203, 7
          %v1205 = vsub.s32 0, %v1204
          %v1206 = vrot.slane %v1201, %v1205
          %v1208 = vadd.f32 %v1200, %v1206
          %v1209 = vsel %vm714, %v1208, 0.0
          %1210 = vadd.xlane.f32.xlu0 %v1209
          %v1211 = vpop.xlane.xlu0 %1210
          %v1212 = vrcp.pop 32.0
          %v1213 = vmul.f32 %v1211, %v1212
          %v1214 = vsub.f32 %v1208, %v1213
          %v1215 = vmul.f32 %v1214, %v1214
          %v1216 = vsel %vm714, %v1215, 0.0
          %1217 = vadd.xlane.f32.xlu0 %v1216
          %v1218 = vpop.xlane.xlu0 %1217
          %v1219 = vmul.f32 %v1218, %v1212
          %v1220 = vadd.f32 %v1219, 1e-05
          %v1221 = vrsqrt.pop %v1220
          %v1222 = vmul.f32 %v1214, %v1221
          %v1223 = vld [vmem:[%s11] sm:$0x1]
          %v1225 = vlaneseq
          %v1226 = vshrl.u32 %v1225, 7
          %v1227 = vsub.s32 0, %v1226
          %v1228 = vrot.slane %v1223, %v1227
          %v1230 = vmul.f32 %v1222, %v1228
          %v1231 = vld [vmem:[%s12] sm:$0x1]
          %v1233 = vlaneseq
          %v1234 = vshrl.u32 %v1233, 7
          %v1235 = vsub.s32 0, %v1234
          %v1236 = vrot.slane %v1231, %v1235
          %v1238 = vadd.f32 %v1230, %v1236
          %v1239 = vld [vmem:[%s7] sm:$0xff]
          %v1240 = vld [vmem:[%s7 + $0x8] sm:$0xff]
          %v1241 = vld [vmem:[%s7 + $0x10] sm:$0xff]
          %v1242 = vld [vmem:[%s7 + $0x18] sm:$0xff]
          %v1243 = vld [vmem:[%s8] sm:$0x1]
          %v1245 = vlaneseq
          %v1246 = vshrl.u32 %v1245, 7
          %v1247 = vsub.s32 0, %v1246
          %v1248 = vrot.slane %v1243, %v1247
          %v1251 = vsel %vm714, %v1238, 0
          %1253 = vmatprep.subr.mxu0 0.0
          %1254 = vmatpush1.msra.mxu0 %v1239
          %1255 = vmatprep.subr.mxu0 0.0
          %1256 = vmatpush1.msra.mxu0 %v1240
          %1257 = vmatprep.subr.mxu0 0.0
          %1258 = vmatpush1.msra.mxu0 %v1241
          %1259 = vmatprep.subr.mxu0 0.0
          %1260 = vmatpush1.msra.mxu0 %v1242
          %1261 = vmatprep.subr.mxu0 0.0
          %1262 = vmatpush1.msra.mxu0 0.0
          %1263 = vmatprep.subr.mxu0 0.0
          %1264 = vmatpush1.msra.mxu0 0.0
          %1265 = vmatprep.subr.mxu0 0.0
          %1266 = vmatpush1.msra.mxu0 0.0
          %1267 = vmatprep.subr.mxu0 0.0
          %1268 = vmatpush1.msra.mxu0 0.0
          %1269 = vmatprep.subr.mxu0 0.0
          %1270 = vmatpush1.msra.mxu0 0.0
          %1271 = vmatprep.subr.mxu0 0.0
          %1272 = vmatpush1.msra.mxu0 0.0
          %1273 = vmatprep.subr.mxu0 0.0
          %1274 = vmatpush1.msra.mxu0 0.0
          %1275 = vmatprep.subr.mxu0 0.0
          %1276 = vmatpush1.msra.mxu0 0.0
          %1277 = vmatprep.subr.mxu0 0.0
          %1278 = vmatpush1.msra.mxu0 0.0
          %1279 = vmatprep.subr.mxu0 0.0
          %1280 = vmatpush1.msra.mxu0 0.0
          %1281 = vmatprep.subr.mxu0 0.0
          %1282 = vmatpush1.msra.mxu0 0.0
          %1283 = vmatprep.subr.mxu0 0.0
          %1284 = vmatpush1.msra.mxu0 0.0
          %1285 = vmatprep.subr.mxu0 0.0
          %1286 = vmatpush1.msra.mxu0 0.0
          %1287 = vmatprep.subr.mxu0 0.0
          %1288 = vmatpush1.msra.mxu0 0.0
          %1289 = vmatprep.subr.mxu0 0.0
          %1290 = vmatpush1.msra.mxu0 0.0
          %1291 = vmatprep.subr.mxu0 0.0
          %1292 = vmatpush1.msra.mxu0 0.0
          %1293 = vmatprep.subr.mxu0 0.0
          %1294 = vmatpush1.msra.mxu0 0.0
          %1295 = vmatprep.subr.mxu0 0.0
          %1296 = vmatpush1.msra.mxu0 0.0
          %1297 = vmatprep.subr.mxu0 0.0
          %1298 = vmatpush1.msra.mxu0 0.0
          %1299 = vmatprep.subr.mxu0 0.0
          %1300 = vmatpush1.msra.mxu0 0.0
          %1301 = vmatprep.subr.mxu0 0.0
          %1302 = vmatpush1.msra.mxu0 0.0
          %1303 = vmatprep.subr.mxu0 0.0
          %1304 = vmatpush1.msra.mxu0 0.0
          %1305 = vmatprep.subr.mxu0 0.0
          %1306 = vmatpush1.msra.mxu0 0.0
          %1307 = vmatprep.subr.mxu0 0.0
          %1308 = vmatpush1.msra.mxu0 0.0
          %1309 = vmatprep.subr.mxu0 0.0
          %1310 = vmatpush1.msra.mxu0 0.0
          %1311 = vmatprep.subr.mxu0 0.0
          %1312 = vmatpush1.msra.mxu0 0.0
          %1313 = vmatprep.subr.mxu0 0.0
          %1314 = vmatpush1.msra.mxu0 0.0
          %1315 = vmatprep.subr.mxu0 0.0
          %1316 = vmatpush1.msra.mxu0 0.0
          %1317 = vmatprep.mubr.f32.mxu0 0.0
          %1318 = vmatmul.mubr.f32.gmra.mrb[0].mxu0 %v1251
          %v1319 = vpop.f32.mrb[0].mxu0
          %v1320 = vadd.f32 %v1248, %v1319
          %v1321 = vpop.f32.mrb[0].mxu0
          %1322 = vdwg.mxu0
          %v1323 = vmax.f32 %v1320, 0.0
          %v1324 = vld [vmem:[%s9] sm:$0xff]
          %v1325 = vld [vmem:[%s9 + $0x8] sm:$0xff]
          %v1326 = vld [vmem:[%s9 + $0x10] sm:$0xff]
          %v1327 = vld [vmem:[%s9 + $0x18] sm:$0xff]
          %v1328 = vld [vmem:[%s9 + $0x20] sm:$0xff]
          %v1329 = vld [vmem:[%s9 + $0x28] sm:$0xff]
          %v1330 = vld [vmem:[%s9 + $0x30] sm:$0xff]
          %v1331 = vld [vmem:[%s9 + $0x38] sm:$0xff]
          %v1332 = vld [vmem:[%s10] sm:$0x1]
          %v1334 = vlaneseq
          %v1335 = vshrl.u32 %v1334, 7
          %v1336 = vsub.s32 0, %v1335
          %v1337 = vrot.slane %v1332, %v1336
          %vm1339 = vcmask 523264
          %v1341 = vsel %vm1339, %v1323, 0
          %1343 = vmatprep.subr.mxu0 0.0
          %1344 = vmatpush1.msra.mxu0 %v1324
          %1345 = vmatprep.subr.mxu0 0.0
          %1346 = vmatpush1.msra.mxu0 %v1325
          %1347 = vmatprep.subr.mxu0 0.0
          %1348 = vmatpush1.msra.mxu0 %v1326
          %1349 = vmatprep.subr.mxu0 0.0
          %1350 = vmatpush1.msra.mxu0 %v1327
          %1351 = vmatprep.subr.mxu0 0.0
          %1352 = vmatpush1.msra.mxu0 %v1328
          %1353 = vmatprep.subr.mxu0 0.0
          %1354 = vmatpush1.msra.mxu0 %v1329
          %1355 = vmatprep.subr.mxu0 0.0
          %1356 = vmatpush1.msra.mxu0 %v1330
          %1357 = vmatprep.subr.mxu0 0.0
          %1358 = vmatpush1.msra.mxu0 %v1331
          %1359 = vmatprep.subr.mxu0 0.0
          %1360 = vmatpush1.msra.mxu0 0.0
          %1361 = vmatprep.subr.mxu0 0.0
          %1362 = vmatpush1.msra.mxu0 0.0
          %1363 = vmatprep.subr.mxu0 0.0
          %1364 = vmatpush1.msra.mxu0 0.0
          %1365 = vmatprep.subr.mxu0 0.0
          %1366 = vmatpush1.msra.mxu0 0.0
          %1367 = vmatprep.subr.mxu0 0.0
          %1368 = vmatpush1.msra.mxu0 0.0
          %1369 = vmatprep.subr.mxu0 0.0
          %1370 = vmatpush1.msra.mxu0 0.0
          %1371 = vmatprep.subr.mxu0 0.0
          %1372 = vmatpush1.msra.mxu0 0.0
          %1373 = vmatprep.subr.mxu0 0.0
          %1374 = vmatpush1.msra.mxu0 0.0
          %1375 = vmatprep.subr.mxu0 0.0
          %1376 = vmatpush1.msra.mxu0 0.0
          %1377 = vmatprep.subr.mxu0 0.0
          %1378 = vmatpush1.msra.mxu0 0.0
          %1379 = vmatprep.subr.mxu0 0.0
          %1380 = vmatpush1.msra.mxu0 0.0
          %1381 = vmatprep.subr.mxu0 0.0
          %1382 = vmatpush1.msra.mxu0 0.0
          %1383 = vmatprep.subr.mxu0 0.0
          %1384 = vmatpush1.msra.mxu0 0.0
          %1385 = vmatprep.subr.mxu0 0.0
          %1386 = vmatpush1.msra.mxu0 0.0
          %1387 = vmatprep.subr.mxu0 0.0
          %1388 = vmatpush1.msra.mxu0 0.0
          %1389 = vmatprep.subr.mxu0 0.0
          %1390 = vmatpush1.msra.mxu0 0.0
          %1391 = vmatprep.subr.mxu0 0.0
          %1392 = vmatpush1.msra.mxu0 0.0
          %1393 = vmatprep.subr.mxu0 0.0
          %1394 = vmatpush1.msra.mxu0 0.0
          %1395 = vmatprep.subr.mxu0 0.0
          %1396 = vmatpush1.msra.mxu0 0.0
          %1397 = vmatprep.subr.mxu0 0.0
          %1398 = vmatpush1.msra.mxu0 0.0
          %1399 = vmatprep.subr.mxu0 0.0
          %1400 = vmatpush1.msra.mxu0 0.0
          %1401 = vmatprep.subr.mxu0 0.0
          %1402 = vmatpush1.msra.mxu0 0.0
          %1403 = vmatprep.subr.mxu0 0.0
          %1404 = vmatpush1.msra.mxu0 0.0
          %1405 = vmatprep.subr.mxu0 0.0
          %1406 = vmatpush1.msra.mxu0 0.0
          %1407 = vmatprep.mubr.f32.mxu0 0.0
          %1408 = vmatmul.mubr.f32.gmra.mrb[0].mxu0 %v1341
          %v1409 = vpop.f32.mrb[0].mxu0
          %v1410 = vadd.f32 %v1337, %v1409
          %v1411 = vpop.f32.mrb[0].mxu0
          %1412 = vdwg.mxu0
          %v1413 = vadd.f32 %v1208, %v1410
          %1414 = vst.msk [vmem:[%s648] sm:$0xff] %vm714, %v1413
        $region152: #{tpu_custom_call.1} parent=135 // pred_fallthru
          _
        %s1415 = sand.u32 %s345, 1
        %s1416 = scalar_lea.sflag [#allocation7], %s1415
        %s1417 = sand.u32 %s345, 1
        %s1418 = smul.addr %s1417, 8
        %s1419 = scalar_lea.vmem [#allocation6], %s1418
        %s1420 = sand.u32 %s373, 1
        %s1421 = scalar_lea.sflag [#allocation9], %s1420
        %s1422 = sand.u32 %s373, 1
        %s1423 = smul.addr %s1422, 8
        %s1424 = scalar_lea.vmem [#allocation8], %s1423
        // Predicated region
        $region153: #{tpu_custom_call.1} parent=135 // pred_check
          %p1425 = pneg %p355
        $region154: #{tpu_custom_call.1} parent=135 // pred_check_branch
          %1427 = sbr.rel (%p1425) target = $region156
        $region155: #{tpu_custom_call.1} parent=135 // pred_region
          %s1429 = ssub.s32 128, 128
          %1430 = vsyncadd %s1416, %s1429
          %s1431 = smul.addr %s36, 128
          %s1432 = scalar_lea.hbm %s13, %s1431
          %s1434 = sshll.u32 %s1419, 4
          %s1435 = int_to_ptr.vmem [resolvable:$true] %s1434
          %1437 = dma.vmem_to_hbm [thread:$0]  %s1435, 128, %s1432, %s1416
        $region156: #{tpu_custom_call.1} parent=135 // pred_fallthru
          _
        // Predicated region
        $region157: #{tpu_custom_call.1} parent=135 // pred_check
          %p1438 = pneg %p383
        $region158: #{tpu_custom_call.1} parent=135 // pred_check_branch
          %1440 = sbr.rel (%p1438) target = $region160
        $region159: #{tpu_custom_call.1} parent=135 // pred_region
          %s1442 = ssub.s32 128, 128
          %1443 = vsyncadd %s1421, %s1442
          %s1444 = smul.addr %s36, 4
          %s1445 = sadd.s32 %s37, %s1444
          %s1446 = smul.addr %s1445, 128
          %s1447 = scalar_lea.hbm %s14, %s1446
          %s1449 = sshll.u32 %s1424, 4
          %s1450 = int_to_ptr.vmem [resolvable:$true] %s1449
          %1452 = dma.vmem_to_hbm [thread:$0]  %s1450, 128, %s1447, %s1421
        $region160: #{tpu_custom_call.1} parent=135 // pred_fallthru
          _
      $region136: #{tpu_custom_call.1} parent=5 // pred_fallthru
        _
      %p1453 = scmp.le.s32.totalorder 2, %s27
      // Predicated region
      $region161: #{tpu_custom_call.1} parent=5 // pred_check
        %p1454 = pneg %p1453
      $region162: #{tpu_custom_call.1} parent=5 // pred_check_branch
        %1456 = sbr.rel (%p1454) target = $region164
      $region163: #{tpu_custom_call.1} parent=5 // pred_region
        %s1457 = ssub.s32 %s27, 2
        // Predicated region
        $region165: #{tpu_custom_call.1} parent=163 // pred_check
          %p1458 = pneg %p361
        $region166: #{tpu_custom_call.1} parent=163 // pred_check_branch
          %1460 = sbr.rel (%p1458) target = $region168
        $region167: #{tpu_custom_call.1} parent=163 // pred_region
          %s1461 = sand.u32 %s346, 1
          %s1462 = scalar_lea.sflag [#allocation7], %s1461
          %s1463 = sand.u32 %s346, 1
          %s1464 = smul.addr %s1463, 8
          %s1465 = scalar_lea.vmem [#allocation6], %s1464
          %1466 = dma.done %s1462, 128
        $region168: #{tpu_custom_call.1} parent=163 // pred_fallthru
          _
        // Predicated region
        $region169: #{tpu_custom_call.1} parent=163 // pred_check
          %p1467 = pneg %p389
        $region170: #{tpu_custom_call.1} parent=163 // pred_check_branch
          %1469 = sbr.rel (%p1467) target = $region172
        $region171: #{tpu_custom_call.1} parent=163 // pred_region
          %s1470 = sand.u32 %s374, 1
          %s1471 = scalar_lea.sflag [#allocation9], %s1470
          %s1472 = sand.u32 %s374, 1
          %s1473 = smul.addr %s1472, 8
          %s1474 = scalar_lea.vmem [#allocation8], %s1473
          %1475 = dma.done %s1471, 128
        $region172: #{tpu_custom_call.1} parent=163 // pred_fallthru
          _
      $region164: #{tpu_custom_call.1} parent=5 // pred_fallthru
        _
    $region6: #{tpu_custom_call.1} parent=1 // loop_footer
      %s31 = sadd.s32 1, %s27
    $region7: #{tpu_custom_call.1} parent=1 // loop_footer_branch
      %26 = sbr.rel target = $region3
    $region8: #{tpu_custom_call.1} parent=1 // loop_exit
      _
    %1476 = vsyncpa [#allocation7], 1
    %s1477 = scalar_lea.sflag [#allocation7], 1
    %1478 = vsyncpa %s1477, 1
    %1479 = vsyncpa [#allocation9], 1
    %s1480 = scalar_lea.sflag [#allocation9], 1
    %1481 = vsyncpa %s1480, 1

</llo_original>
